<compile_context>
chip_gen: v7x
topology: tpu7x:2x2x1
jax: 0.10.0
libtpu: 0.0.40
codegen_flags: <defaults>
</compile_context>

<pallas_src>
import functools

import jax
import jax.numpy as jnp
from jax import lax
from jax.experimental import pallas as pl
from jax.experimental.pallas import tpu as pltpu

# ---- small synthetic CLIP text-tower dims (real CLIP ViT-B/32: T=77, D=512, H=8, L=12) ----
B = 2          # number of prompts (LP builds 1; generalized to a small batch)
T = 8          # context length
D = 32         # transformer width
H = 4          # attention heads
HD = D // H    # head dim
L = 2          # transformer layers
P = 32         # text projection dim
N_LEARN = 3    # number of learnable prompt tokens
EPS = 1e-5
NEG_INF = -1e9


def _layernorm(x, g, b):
    mu = jnp.mean(x, axis=-1, keepdims=True)
    var = jnp.mean((x - mu) ** 2, axis=-1, keepdims=True)
    return (x - mu) * lax.rsqrt(var + EPS) * g + b


# ------------------------------ fused LP forward kernel ------------------------------
def lp_kernel(eot_ref,                                     # scalar prefetch (SMEM), (B,)
              prompts_ref, mask_ref,
              ln1w_ref, ln1b_ref, wqkv_ref, bqkv_ref, wo_ref, bo_ref,
              ln2w_ref, ln2b_ref, w1_ref, b1_ref, w2_ref, b2_ref,
              lnf_g_ref, lnf_b_ref, proj_ref,
              out_ref,
              carry_ref,                                   # VMEM f32 (B, Tp, D) residual stream
              *, num_heads: int, norm: bool = True):
    layer = pl.program_id(0)
    b_sz, t_sz, d_sz = carry_ref.shape
    hd = d_sz // num_heads
    bt = b_sz * t_sz

    # Initialize the residual-stream carry at layer 0 (positional embedding already
    # added in the wrapper).  The carry lives in VMEM scratch, which persists across
    # grid iterations; the layer axis must stay "arbitrary" (sequential).
    @pl.when(layer == 0)
    def _():
        carry_ref[...] = prompts_ref[...].astype(jnp.float32)

    x = carry_ref[...]                                     # (B, Tp, D) f32

    # ---------------- multi-head causal self-attention (pre-LN) ----------------
    xn = _layernorm(x, ln1w_ref[0].astype(jnp.float32), ln1b_ref[0].astype(jnp.float32))
    xn2d = xn.reshape(bt, d_sz).astype(jnp.bfloat16)       # fold batch: M = B*Tp
    qkv = jnp.dot(xn2d, wqkv_ref[0], preferred_element_type=jnp.float32)
    qkv = qkv + bqkv_ref[0].astype(jnp.float32)            # (B*Tp, 3D)
    qkv = qkv.reshape(b_sz, t_sz, 3 * d_sz)
    # 1/sqrt(HD) is already folded into the Q columns of wqkv/bqkv in the wrapper.
    q = qkv[..., :d_sz]
    k = qkv[..., d_sz:2 * d_sz]
    v = qkv[..., 2 * d_sz:]

    mask = mask_ref[...]                                   # (Tp, Tp) causal (+pad) mask, hoisted

    ctxs = []
    for h in range(num_heads):                             # static unroll, H=4
        sl = slice(h * hd, (h + 1) * hd)
        qh = q[..., sl].astype(jnp.bfloat16)               # (B, Tp, HD)
        kh = k[..., sl].astype(jnp.bfloat16)
        vh = v[..., sl].astype(jnp.bfloat16)
        s = jnp.einsum('bqd,bkd->bqk', qh, kh,
                       preferred_element_type=jnp.float32) + mask
        s = s - jnp.max(s, axis=-1, keepdims=True)
        p = jnp.exp(s)
        p = p * pl.reciprocal(jnp.sum(p, axis=-1, keepdims=True), approx=True)
        ctxs.append(jnp.einsum('bqk,bkd->bqd', p.astype(jnp.bfloat16), vh,
                               preferred_element_type=jnp.float32))   # (B, Tp, HD)
    # lane-concat heads, single full-depth output projection (K = D, not HD)
    ctx = jnp.concatenate(ctxs, axis=-1)                   # (B, Tp, D)
    attn_out = jnp.dot(ctx.reshape(bt, d_sz).astype(jnp.bfloat16), wo_ref[0],
                       preferred_element_type=jnp.float32) + bo_ref[0].astype(jnp.float32)
    x = x + attn_out.reshape(b_sz, t_sz, d_sz)

    # ---------------- MLP with QuickGELU (as in CLIP) ----------------
    xn2 = _layernorm(x, ln2w_ref[0].astype(jnp.float32), ln2b_ref[0].astype(jnp.float32))
    hid = jnp.dot(xn2.reshape(bt, d_sz).astype(jnp.bfloat16), w1_ref[0],
                  preferred_element_type=jnp.float32) + b1_ref[0].astype(jnp.float32)
    hid = hid * jax.nn.sigmoid(1.702 * hid)
    mlp = jnp.dot(hid.astype(jnp.bfloat16), w2_ref[0],
                  preferred_element_type=jnp.float32) + b2_ref[0].astype(jnp.float32)
    x = x + mlp.reshape(b_sz, t_sz, d_sz)

    carry_ref[...] = x

    # ---------------- fused head epilogue on the last layer ----------------
    @pl.when(layer == pl.num_programs(0) - 1)
    def _():
        # EOT gather: dynamic sublane slice of the carry ref using the scalar-prefetched
        # argmax index (no masked reduce over T).
        rows = []
        for b in range(b_sz):                              # static unroll, B=2
            rows.append(carry_ref[b, pl.ds(eot_ref[b], 1), :])       # (1, D)
        x_eot = jnp.concatenate(rows, axis=0)              # (B, D)
        xn_f = _layernorm(x_eot, lnf_g_ref[...].astype(jnp.float32),
                          lnf_b_ref[...].astype(jnp.float32))
        y = jnp.dot(xn_f.astype(jnp.bfloat16), proj_ref[...],
                    preferred_element_type=jnp.float32)    # (B, P)
        if norm:
            y = y * lax.rsqrt(jnp.sum(y * y, axis=-1, keepdims=True) + 1e-12)
        out_ref[...] = y.astype(out_ref.dtype)


def _param_spec(arr):
    # stacked per-layer parameter: select layer `l`, take full trailing dims.
    return pl.BlockSpec((1,) + arr.shape[1:], lambda l, eot: (l, 0, 0))


def lp_forward(prefix, learning_vectors, suffix, pos, layer_params,
               lnf_g, lnf_b, text_proj, tokens, norm=True):
    # pre-add the positional embedding here (drops one (B,T,D) input stream)
    prompts = jnp.concatenate([prefix, learning_vectors, suffix], axis=1) + pos   # (B, T, D)
    b_sz, t_orig, d_sz = prompts.shape
    eot = jnp.argmax(tokens, axis=-1).astype(jnp.int32)                           # (B,)

    # pad T to a sublane multiple (real CLIP: 77 -> 80) so (B*T, D) reshapes and
    # matmul M stay vreg-aligned; padded key positions are beyond every real query's
    # causal window so the causal mask already hides them.
    t_pad = ((t_orig + 7) // 8) * 8
    if t_pad != t_orig:
        prompts = jnp.pad(prompts, ((0, 0), (0, t_pad - t_orig), (0, 0)))

    # causal mask built once here (hoisted out of the per-layer grid step)
    row = lax.broadcasted_iota(jnp.int32, (t_pad, t_pad), 0)
    col = lax.broadcasted_iota(jnp.int32, (t_pad, t_pad), 1)
    mask = jnp.where(col > row, NEG_INF, 0.0).astype(jnp.float32)

    # fold the 1/sqrt(HD) attention scale into the Q columns of wqkv / bqkv offline
    (ln1w, ln1b, wqkv, bqkv, wo, bo, ln2w, ln2b, w1, b1, w2, b2) = layer_params
    scale = 1.0 / float(d_sz // H) ** 0.5
    wqkv_s = wqkv.astype(jnp.float32)
    wqkv_s = wqkv_s.at[..., :d_sz].multiply(scale)
    wqkv_s = wqkv_s.astype(wqkv.dtype)
    bqkv_s = bqkv.at[..., :d_sz].multiply(scale)
    layer_params = [ln1w, ln1b, wqkv_s, bqkv_s, wo, bo, ln2w, ln2b, w1, b1, w2, b2]

    p_sz = text_proj.shape[-1]

    in_specs = [
        pl.BlockSpec((b_sz, t_pad, d_sz), lambda l, eot: (0, 0, 0)),   # prompts (+pos)
        pl.BlockSpec((t_pad, t_pad), lambda l, eot: (0, 0)),           # causal mask
    ] + [_param_spec(p) for p in layer_params] + [
        pl.BlockSpec((1, d_sz), lambda l, eot: (0, 0)),                # ln_final gamma
        pl.BlockSpec((1, d_sz), lambda l, eot: (0, 0)),                # ln_final beta
        pl.BlockSpec((d_sz, p_sz), lambda l, eot: (0, 0)),             # text projection
    ]

    return pl.pallas_call(
        functools.partial(lp_kernel, num_heads=H, norm=norm),
        out_shape=jax.ShapeDtypeStruct((b_sz, p_sz), jnp.float32),
        grid_spec=pltpu.PrefetchScalarGridSpec(
            num_scalar_prefetch=1,
            grid=(L,),
            in_specs=in_specs,
            out_specs=pl.BlockSpec((b_sz, p_sz), lambda l, eot: (0, 0)),
            scratch_shapes=[pltpu.VMEM((b_sz, t_pad, d_sz), jnp.float32)]),
        compiler_params=pltpu.CompilerParams(
            # layer axis carries the residual stream -> must be sequential
            dimension_semantics=("arbitrary",),
            # headroom for double-buffered per-layer bf16 weights at real CLIP dims
            # (v5e default scoped VMEM is 16 MiB; keep under v7x's 64 MiB physical)
            vmem_limit_bytes=48 * 1024 * 1024),
    )(eot, prompts, mask, *layer_params, lnf_g, lnf_b, text_proj)


# --------------------------------- pure-JAX reference --------------------------------
def reference_forward(prefix, learning_vectors, suffix, pos, layer_params,
                      lnf_g, lnf_b, text_proj, tokens):
    (ln1w, ln1b, wqkv, bqkv, wo, bo, ln2w, ln2b, w1, b1, w2, b2) = [
        p.astype(jnp.float32) for p in layer_params]
    text_proj = text_proj.astype(jnp.float32)
    x = jnp.concatenate([prefix, learning_vectors, suffix], axis=1) + pos  # (B,T,D)

    row = lax.broadcasted_iota(jnp.int32, (T, T), 0)
    col = lax.broadcasted_iota(jnp.int32, (T, T), 1)
    mask = jnp.where(col > row, NEG_INF, 0.0).astype(jnp.float32)
    scale = 1.0 / float(HD) ** 0.5

    for l in range(L):
        xn = _layernorm(x, ln1w[l], ln1b[l])
        qkv = jnp.einsum("btd,de->bte", xn, wqkv[l],
                         preferred_element_type=jnp.float32) + bqkv[l]
        q, k, v = qkv[..., :D], qkv[..., D:2 * D], qkv[..., 2 * D:]
        q = q.reshape(B, T, H, HD).transpose(0, 2, 1, 3)
        k = k.reshape(B, T, H, HD).transpose(0, 2, 1, 3)
        v = v.reshape(B, T, H, HD).transpose(0, 2, 1, 3)
        s = jnp.einsum("bhqd,bhkd->bhqk", q, k,
                       preferred_element_type=jnp.float32) * scale + mask
        s = s - jnp.max(s, axis=-1, keepdims=True)
        p = jnp.exp(s)
        p = p / jnp.sum(p, axis=-1, keepdims=True)
        o = jnp.einsum("bhqk,bhkd->bhqd", p, v, preferred_element_type=jnp.float32)
        o = o.transpose(0, 2, 1, 3).reshape(B, T, D)
        x = x + jnp.einsum("btd,de->bte", o, wo[l],
                           preferred_element_type=jnp.float32) + bo[l]
        xn2 = _layernorm(x, ln2w[l], ln2b[l])
        hid = jnp.einsum("btd,de->bte", xn2, w1[l],
                         preferred_element_type=jnp.float32) + b1[l]
        hid = hid * jax.nn.sigmoid(1.702 * hid)
        x = x + jnp.einsum("bte,ed->btd", hid, w2[l],
                           preferred_element_type=jnp.float32) + b2[l]

    x = _layernorm(x, lnf_g, lnf_b)
    eot = jnp.argmax(tokens, axis=-1)
    x = jnp.take_along_axis(x, eot[:, None, None], axis=1)[:, 0]          # (B, D)
    y = jnp.dot(x, text_proj, preferred_element_type=jnp.float32)
    return y / jnp.linalg.norm(y, axis=-1, keepdims=True)


# ------------------------------------- driver ----------------------------------------
if __name__ == "__main__":
    key = jax.random.PRNGKey(0)
    ks = jax.random.split(key, 24)

    # token embedding of the template -> prefix / learnable midfix / suffix
    embedding = 0.02 * jax.random.normal(ks[0], (B, T, D), jnp.float32)
    prefix = embedding[:, 0:1, :]
    learning_vectors = embedding[:, 1:1 + N_LEARN, :]           # the nn.Parameter
    suffix = embedding[:, 1 + N_LEARN:, :]
    pos = 0.01 * jax.random.normal(ks[1], (1, T, D), jnp.float32)

    # stacked per-layer transformer weights (leading layer dim for BlockSpec selection)
    # matmul weights stored in bf16 (MXU bf16 path, half the DMA bytes); LN params and
    # biases stay f32.
    ln1w = 1.0 + 0.1 * jax.random.normal(ks[2], (L, 1, D), jnp.float32)
    ln1b = 0.02 * jax.random.normal(ks[3], (L, 1, D), jnp.float32)
    wqkv = (0.02 * jax.random.normal(ks[4], (L, D, 3 * D), jnp.float32)).astype(jnp.bfloat16)
    bqkv = 0.02 * jax.random.normal(ks[5], (L, 1, 3 * D), jnp.float32)
    wo = (0.02 * jax.random.normal(ks[6], (L, D, D), jnp.float32)).astype(jnp.bfloat16)
    bo = 0.02 * jax.random.normal(ks[7], (L, 1, D), jnp.float32)
    ln2w = 1.0 + 0.1 * jax.random.normal(ks[8], (L, 1, D), jnp.float32)
    ln2b = 0.02 * jax.random.normal(ks[9], (L, 1, D), jnp.float32)
    w1 = (0.02 * jax.random.normal(ks[10], (L, D, 4 * D), jnp.float32)).astype(jnp.bfloat16)
    b1 = 0.02 * jax.random.normal(ks[11], (L, 1, 4 * D), jnp.float32)
    w2 = (0.02 * jax.random.normal(ks[12], (L, 4 * D, D), jnp.float32)).astype(jnp.bfloat16)
    b2 = 0.02 * jax.random.normal(ks[13], (L, 1, D), jnp.float32)
    layer_params = [ln1w, ln1b, wqkv, bqkv, wo, bo, ln2w, ln2b, w1, b1, w2, b2]

    lnf_g = (1.0 + 0.1 * jax.random.normal(ks[14], (1, D), jnp.float32))
    lnf_b = 0.02 * jax.random.normal(ks[15], (1, D), jnp.float32)
    text_proj = (0.02 * jax.random.normal(ks[16], (D, P), jnp.float32)).astype(jnp.bfloat16)

    # synthetic token ids with a distinct EOT (argmax) position per row
    tokens = jax.random.randint(ks[17], (B, T), 1, 50, jnp.int32)
    tokens = tokens.at[0, 5].set(1000).at[1, 6].set(1000)

    out = lp_forward(prefix, learning_vectors, suffix, pos, layer_params,
                     lnf_g, lnf_b, text_proj, tokens, norm=True)
    out = jax.block_until_ready(out)

    ref = reference_forward(prefix, learning_vectors, suffix, pos, layer_params,
                            lnf_g, lnf_b, text_proj, tokens)
    ref = jax.block_until_ready(ref)

    max_err = float(jnp.max(jnp.abs(out - ref)))
    assert out.shape == (B, P), out.shape
    # tolerance accounts for bf16 matmul operands, the scale folded into bf16 Q weights,
    # and approx-reciprocal softmax vs the pure-f32 reference (same bf16 weight values
    # are used by both).
    assert max_err < 2e-2, f"mismatch vs reference: {max_err}"
    print("KERNEL_OK")
</pallas_src>

<mosaic_0001>
module attributes {stable_mosaic.version = 11 : i64} {
  func.func @lp_kernel(%arg0: i32, %arg1: memref<2xi32, #tpu.memory_space<smem>>, %arg2: memref<2x8x32xf32, #tpu.memory_space<vmem>>, %arg3: memref<8x8xf32, #tpu.memory_space<vmem>>, %arg4: memref<1x1x32xf32, #tpu.memory_space<vmem>>, %arg5: memref<1x1x32xf32, #tpu.memory_space<vmem>>, %arg6: memref<1x32x96xbf16, #tpu.memory_space<vmem>>, %arg7: memref<1x1x96xf32, #tpu.memory_space<vmem>>, %arg8: memref<1x32x32xbf16, #tpu.memory_space<vmem>>, %arg9: memref<1x1x32xf32, #tpu.memory_space<vmem>>, %arg10: memref<1x1x32xf32, #tpu.memory_space<vmem>>, %arg11: memref<1x1x32xf32, #tpu.memory_space<vmem>>, %arg12: memref<1x32x128xbf16, #tpu.memory_space<vmem>>, %arg13: memref<1x1x128xf32, #tpu.memory_space<vmem>>, %arg14: memref<1x128x32xbf16, #tpu.memory_space<vmem>>, %arg15: memref<1x1x32xf32, #tpu.memory_space<vmem>>, %arg16: memref<1x32xf32, #tpu.memory_space<vmem>>, %arg17: memref<1x32xf32, #tpu.memory_space<vmem>>, %arg18: memref<32x32xbf16, #tpu.memory_space<vmem>>, %arg19: memref<2x32xf32, #tpu.memory_space<vmem>>, %arg20: memref<2x8x32xf32, #tpu.memory_space<vmem>>) attributes {dimension_semantics = [#tpu.dimension_semantics<arbitrary>], iteration_bounds = array<i64: 2>, scalar_prefetch = 1 : i64, scratch_operands = 1 : i64, tpu.core_type = #tpu.core_type<tc>, window_params = [{pipeline_mode = #tpu.pipeline_mode<synchronous>, transform_indices = @transform_0, window_bounds = array<i64: 2, 8, 32>}, {pipeline_mode = #tpu.pipeline_mode<synchronous>, transform_indices = @transform_1, window_bounds = array<i64: 8, 8>}, {transform_indices = @transform_2, window_bounds = array<i64: 1, 1, 32>}, {transform_indices = @transform_3, window_bounds = array<i64: 1, 1, 32>}, {transform_indices = @transform_4, window_bounds = array<i64: 1, 32, 96>}, {transform_indices = @transform_5, window_bounds = array<i64: 1, 1, 96>}, {transform_indices = @transform_6, window_bounds = array<i64: 1, 32, 32>}, {transform_indices = @transform_7, window_bounds = array<i64: 1, 1, 32>}, {transform_indices = @transform_8, window_bounds = array<i64: 1, 1, 32>}, {transform_indices = @transform_9, window_bounds = array<i64: 1, 1, 32>}, {transform_indices = @transform_10, window_bounds = array<i64: 1, 32, 128>}, {transform_indices = @transform_11, window_bounds = array<i64: 1, 1, 128>}, {transform_indices = @transform_12, window_bounds = array<i64: 1, 128, 32>}, {transform_indices = @transform_13, window_bounds = array<i64: 1, 1, 32>}, {pipeline_mode = #tpu.pipeline_mode<synchronous>, transform_indices = @transform_14, window_bounds = array<i64: 1, 32>}, {pipeline_mode = #tpu.pipeline_mode<synchronous>, transform_indices = @transform_15, window_bounds = array<i64: 1, 32>}, {pipeline_mode = #tpu.pipeline_mode<synchronous>, transform_indices = @transform_16, window_bounds = array<i64: 32, 32>}, {pipeline_mode = #tpu.pipeline_mode<synchronous>, transform_indices = @transform_17, window_bounds = array<i64: 2, 32>}]} {
    %c0_i32 = arith.constant 0 : i32
    %0 = arith.cmpi eq, %arg0, %c0_i32 : i32
    %1 = arith.extui %0 : i1 to i32
    %c0_i32_0 = arith.constant 0 : i32
    %2 = arith.cmpi ne, %1, %c0_i32_0 : i32
    scf.if %2 {
      %c0_76 = arith.constant 0 : index
      %c0_77 = arith.constant 0 : index
      %c0_78 = arith.constant 0 : index
      %205 = vector.load %arg2[%c0_76, %c0_77, %c0_78] : memref<2x8x32xf32, #tpu.memory_space<vmem>>, vector<2x8x32xf32>
      %c0_79 = arith.constant 0 : index
      %c0_80 = arith.constant 0 : index
      %c0_81 = arith.constant 0 : index
      %206 = vector.load %arg20[%c0_79, %c0_80, %c0_81] : memref<2x8x32xf32, #tpu.memory_space<vmem>>, vector<2x8x32xf32>
      tpu.vector_store %arg20[%c0_79, %c0_80, %c0_81], %205 {strides = array<i32>} : memref<2x8x32xf32, #tpu.memory_space<vmem>>, vector<2x8x32xf32>,
    } else {
    }
    %c0 = arith.constant 0 : index
    %c0_1 = arith.constant 0 : index
    %c0_2 = arith.constant 0 : index
    %3 = vector.load %arg20[%c0, %c0_1, %c0_2] : memref<2x8x32xf32, #tpu.memory_space<vmem>>, vector<2x8x32xf32>
    %c0_3 = arith.constant 0 : index
    %c0_4 = arith.constant 0 : index
    %c0_5 = arith.constant 0 : index
    %4 = vector.load %arg4[%c0_3, %c0_4, %c0_5] : memref<1x1x32xf32, #tpu.memory_space<vmem>>, vector<1x1x32xf32>
    %5 = vector.shape_cast %4 : vector<1x1x32xf32> to vector<1x32xf32>
    %c0_6 = arith.constant 0 : index
    %c0_7 = arith.constant 0 : index
    %c0_8 = arith.constant 0 : index
    %6 = vector.load %arg5[%c0_6, %c0_7, %c0_8] : memref<1x1x32xf32, #tpu.memory_space<vmem>>, vector<1x1x32xf32>
    %7 = vector.shape_cast %6 : vector<1x1x32xf32> to vector<1x32xf32>
    %cst = arith.constant dense<0.000000e+00> : vector<2x8xf32>
    %8 = vector.multi_reduction <add>, %3, %cst [2] : vector<2x8x32xf32> to vector<2x8xf32>
    %9 = vector.shape_cast %8 : vector<2x8xf32> to vector<2x8x1xf32>
    %cst_9 = arith.constant 3.200000e+01 : f32
    %10 = vector.broadcast %cst_9 : f32 to vector<2x8x1xf32>
    %11 = arith.divf %9, %10 : vector<2x8x1xf32>
    %12 = vector.broadcast %11 : vector<2x8x1xf32> to vector<2x8x32xf32>
    %13 = arith.subf %3, %12 : vector<2x8x32xf32>
    %14 = arith.mulf %13, %13 : vector<2x8x32xf32>
    %cst_10 = arith.constant dense<0.000000e+00> : vector<2x8xf32>
    %15 = vector.multi_reduction <add>, %14, %cst_10 [2] : vector<2x8x32xf32> to vector<2x8xf32>
    %16 = vector.shape_cast %15 : vector<2x8xf32> to vector<2x8x1xf32>
    %cst_11 = arith.constant 3.200000e+01 : f32
    %17 = vector.broadcast %cst_11 : f32 to vector<2x8x1xf32>
    %18 = arith.divf %16, %17 : vector<2x8x1xf32>
    %19 = vector.broadcast %11 : vector<2x8x1xf32> to vector<2x8x32xf32>
    %20 = arith.subf %3, %19 : vector<2x8x32xf32>
    %cst_12 = arith.constant 9.99999974E-6 : f32
    %21 = vector.broadcast %cst_12 : f32 to vector<2x8x1xf32>
    %22 = arith.addf %18, %21 : vector<2x8x1xf32>
    %23 = math.rsqrt %22 : vector<2x8x1xf32>
    %24 = vector.broadcast %23 : vector<2x8x1xf32> to vector<2x8x32xf32>
    %25 = arith.mulf %20, %24 : vector<2x8x32xf32>
    %26 = vector.shape_cast %5 : vector<1x32xf32> to vector<1x1x32xf32>
    %27 = vector.broadcast %26 : vector<1x1x32xf32> to vector<2x8x32xf32>
    %28 = arith.mulf %25, %27 : vector<2x8x32xf32>
    %29 = vector.shape_cast %7 : vector<1x32xf32> to vector<1x1x32xf32>
    %30 = vector.broadcast %29 : vector<1x1x32xf32> to vector<2x8x32xf32>
    %31 = arith.addf %28, %30 : vector<2x8x32xf32>
    %32 = vector.shape_cast %31 : vector<2x8x32xf32> to vector<16x32xf32>
    %33 = arith.truncf %32 : vector<16x32xf32> to vector<16x32xbf16>
    %c0_13 = arith.constant 0 : index
    %c0_14 = arith.constant 0 : index
    %c0_15 = arith.constant 0 : index
    %34 = vector.load %arg6[%c0_13, %c0_14, %c0_15] : memref<1x32x96xbf16, #tpu.memory_space<vmem>>, vector<1x32x96xbf16>
    %35 = vector.shape_cast %34 : vector<1x32x96xbf16> to vector<32x96xbf16>
    %cst_16 = arith.constant dense<0.000000e+00> : vector<16x96xf32>
    %36 = tpu.matmul %33, %35, %cst_16 {dimension_numbers = #tpu.dot_dimension_numbers<[1], [0], [0], [1], [0, 0, 1, 1], [], []>} : vector<16x32xbf16>, vector<32x96xbf16>, vector<16x96xf32> -> vector<16x96xf32>
    %c0_17 = arith.constant 0 : index
    %c0_18 = arith.constant 0 : index
    %c0_19 = arith.constant 0 : index
    %37 = vector.load %arg7[%c0_17, %c0_18, %c0_19] : memref<1x1x96xf32, #tpu.memory_space<vmem>>, vector<1x1x96xf32>
    %38 = vector.shape_cast %37 : vector<1x1x96xf32> to vector<1x96xf32>
    %39 = vector.broadcast %38 : vector<1x96xf32> to vector<16x96xf32>
    %40 = arith.addf %36, %39 : vector<16x96xf32>
    %41 = vector.shape_cast %40 : vector<16x96xf32> to vector<2x8x96xf32>
    %42 = vector.extract_strided_slice %41 {offsets = [0, 0, 0], sizes = [2, 8, 32], strides = [1, 1, 1]} : vector<2x8x96xf32> to vector<2x8x32xf32>
    %43 = vector.extract_strided_slice %41 {offsets = [0, 0, 32], sizes = [2, 8, 32], strides = [1, 1, 1]} : vector<2x8x96xf32> to vector<2x8x32xf32>
    %44 = vector.extract_strided_slice %41 {offsets = [0, 0, 64], sizes = [2, 8, 32], strides = [1, 1, 1]} : vector<2x8x96xf32> to vector<2x8x32xf32>
    %c0_20 = arith.constant 0 : index
    %c0_21 = arith.constant 0 : index
    %45 = vector.load %arg3[%c0_20, %c0_21] : memref<8x8xf32, #tpu.memory_space<vmem>>, vector<8x8xf32>
    %46 = vector.extract_strided_slice %42 {offsets = [0, 0, 0], sizes = [2, 8, 8], strides = [1, 1, 1]} : vector<2x8x32xf32> to vector<2x8x8xf32>
    %47 = arith.truncf %46 : vector<2x8x8xf32> to vector<2x8x8xbf16>
    %48 = vector.extract_strided_slice %43 {offsets = [0, 0, 0], sizes = [2, 8, 8], strides = [1, 1, 1]} : vector<2x8x32xf32> to vector<2x8x8xf32>
    %49 = arith.truncf %48 : vector<2x8x8xf32> to vector<2x8x8xbf16>
    %50 = vector.extract_strided_slice %44 {offsets = [0, 0, 0], sizes = [2, 8, 8], strides = [1, 1, 1]} : vector<2x8x32xf32> to vector<2x8x8xf32>
    %51 = arith.truncf %50 : vector<2x8x8xf32> to vector<2x8x8xbf16>
    "tpu.trace_start"() <{level = 10 : i32, message = "bqd,bkd->bqk"}> : () -> ()
    %cst_22 = arith.constant dense<0.000000e+00> : vector<2x8x8xf32>
    %52 = tpu.matmul %47, %49, %cst_22 {dimension_numbers = #tpu.dot_dimension_numbers<[2], [2], [1], [1], [0, 0, 0, 1, 1, 1], [0], [0]>} : vector<2x8x8xbf16>, vector<2x8x8xbf16>, vector<2x8x8xf32> -> vector<2x8x8xf32>
    "tpu.trace_stop"() : () -> ()
    %53 = vector.shape_cast %45 : vector<8x8xf32> to vector<1x8x8xf32>
    %54 = vector.broadcast %53 : vector<1x8x8xf32> to vector<2x8x8xf32>
    %55 = arith.addf %52, %54 : vector<2x8x8xf32>
    %cst_23 = arith.constant dense<0xFF800000> : vector<2x8xf32>
    %56 = vector.multi_reduction <maximumf>, %55, %cst_23 [2] : vector<2x8x8xf32> to vector<2x8xf32>
    %57 = vector.shape_cast %56 : vector<2x8xf32> to vector<2x8x1xf32>
    %58 = vector.broadcast %57 : vector<2x8x1xf32> to vector<2x8x8xf32>
    %59 = arith.subf %55, %58 : vector<2x8x8xf32>
    %60 = math.exp %59 : vector<2x8x8xf32>
    %cst_24 = arith.constant dense<0.000000e+00> : vector<2x8xf32>
    %61 = vector.multi_reduction <add>, %60, %cst_24 [2] : vector<2x8x8xf32> to vector<2x8xf32>
    %62 = vector.shape_cast %61 : vector<2x8xf32> to vector<2x8x1xf32>
    %63 = tpu.reciprocal %62 {approx = true} : vector<2x8x1xf32> -> vector<2x8x1xf32>
    %64 = vector.broadcast %63 : vector<2x8x1xf32> to vector<2x8x8xf32>
    %65 = arith.mulf %60, %64 : vector<2x8x8xf32>
    %66 = arith.truncf %65 : vector<2x8x8xf32> to vector<2x8x8xbf16>
    "tpu.trace_start"() <{level = 10 : i32, message = "bqk,bkd->bqd"}> : () -> ()
    %cst_25 = arith.constant dense<0.000000e+00> : vector<2x8x8xf32>
    %67 = tpu.matmul %66, %51, %cst_25 {dimension_numbers = #tpu.dot_dimension_numbers<[2], [1], [1], [2], [0, 0, 0, 1, 1, 2], [0], [0]>} : vector<2x8x8xbf16>, vector<2x8x8xbf16>, vector<2x8x8xf32> -> vector<2x8x8xf32>
    "tpu.trace_stop"() : () -> ()
    %68 = vector.extract_strided_slice %42 {offsets = [0, 0, 8], sizes = [2, 8, 8], strides = [1, 1, 1]} : vector<2x8x32xf32> to vector<2x8x8xf32>
    %69 = arith.truncf %68 : vector<2x8x8xf32> to vector<2x8x8xbf16>
    %70 = vector.extract_strided_slice %43 {offsets = [0, 0, 8], sizes = [2, 8, 8], strides = [1, 1, 1]} : vector<2x8x32xf32> to vector<2x8x8xf32>
    %71 = arith.truncf %70 : vector<2x8x8xf32> to vector<2x8x8xbf16>
    %72 = vector.extract_strided_slice %44 {offsets = [0, 0, 8], sizes = [2, 8, 8], strides = [1, 1, 1]} : vector<2x8x32xf32> to vector<2x8x8xf32>
    %73 = arith.truncf %72 : vector<2x8x8xf32> to vector<2x8x8xbf16>
    "tpu.trace_start"() <{level = 10 : i32, message = "bqd,bkd->bqk"}> : () -> ()
    %cst_26 = arith.constant dense<0.000000e+00> : vector<2x8x8xf32>
    %74 = tpu.matmul %69, %71, %cst_26 {dimension_numbers = #tpu.dot_dimension_numbers<[2], [2], [1], [1], [0, 0, 0, 1, 1, 1], [0], [0]>} : vector<2x8x8xbf16>, vector<2x8x8xbf16>, vector<2x8x8xf32> -> vector<2x8x8xf32>
    "tpu.trace_stop"() : () -> ()
    %75 = vector.shape_cast %45 : vector<8x8xf32> to vector<1x8x8xf32>
    %76 = vector.broadcast %75 : vector<1x8x8xf32> to vector<2x8x8xf32>
    %77 = arith.addf %74, %76 : vector<2x8x8xf32>
    %cst_27 = arith.constant dense<0xFF800000> : vector<2x8xf32>
    %78 = vector.multi_reduction <maximumf>, %77, %cst_27 [2] : vector<2x8x8xf32> to vector<2x8xf32>
    %79 = vector.shape_cast %78 : vector<2x8xf32> to vector<2x8x1xf32>
    %80 = vector.broadcast %79 : vector<2x8x1xf32> to vector<2x8x8xf32>
    %81 = arith.subf %77, %80 : vector<2x8x8xf32>
    %82 = math.exp %81 : vector<2x8x8xf32>
    %cst_28 = arith.constant dense<0.000000e+00> : vector<2x8xf32>
    %83 = vector.multi_reduction <add>, %82, %cst_28 [2] : vector<2x8x8xf32> to vector<2x8xf32>
    %84 = vector.shape_cast %83 : vector<2x8xf32> to vector<2x8x1xf32>
    %85 = tpu.reciprocal %84 {approx = true} : vector<2x8x1xf32> -> vector<2x8x1xf32>
    %86 = vector.broadcast %85 : vector<2x8x1xf32> to vector<2x8x8xf32>
    %87 = arith.mulf %82, %86 : vector<2x8x8xf32>
    %88 = arith.truncf %87 : vector<2x8x8xf32> to vector<2x8x8xbf16>
    "tpu.trace_start"() <{level = 10 : i32, message = "bqk,bkd->bqd"}> : () -> ()
    %cst_29 = arith.constant dense<0.000000e+00> : vector<2x8x8xf32>
    %89 = tpu.matmul %88, %73, %cst_29 {dimension_numbers = #tpu.dot_dimension_numbers<[2], [1], [1], [2], [0, 0, 0, 1, 1, 2], [0], [0]>} : vector<2x8x8xbf16>, vector<2x8x8xbf16>, vector<2x8x8xf32> -> vector<2x8x8xf32>
    "tpu.trace_stop"() : () -> ()
    %90 = vector.extract_strided_slice %42 {offsets = [0, 0, 16], sizes = [2, 8, 8], strides = [1, 1, 1]} : vector<2x8x32xf32> to vector<2x8x8xf32>
    %91 = arith.truncf %90 : vector<2x8x8xf32> to vector<2x8x8xbf16>
    %92 = vector.extract_strided_slice %43 {offsets = [0, 0, 16], sizes = [2, 8, 8], strides = [1, 1, 1]} : vector<2x8x32xf32> to vector<2x8x8xf32>
    %93 = arith.truncf %92 : vector<2x8x8xf32> to vector<2x8x8xbf16>
    %94 = vector.extract_strided_slice %44 {offsets = [0, 0, 16], sizes = [2, 8, 8], strides = [1, 1, 1]} : vector<2x8x32xf32> to vector<2x8x8xf32>
    %95 = arith.truncf %94 : vector<2x8x8xf32> to vector<2x8x8xbf16>
    "tpu.trace_start"() <{level = 10 : i32, message = "bqd,bkd->bqk"}> : () -> ()
    %cst_30 = arith.constant dense<0.000000e+00> : vector<2x8x8xf32>
    %96 = tpu.matmul %91, %93, %cst_30 {dimension_numbers = #tpu.dot_dimension_numbers<[2], [2], [1], [1], [0, 0, 0, 1, 1, 1], [0], [0]>} : vector<2x8x8xbf16>, vector<2x8x8xbf16>, vector<2x8x8xf32> -> vector<2x8x8xf32>
    "tpu.trace_stop"() : () -> ()
    %97 = vector.shape_cast %45 : vector<8x8xf32> to vector<1x8x8xf32>
    %98 = vector.broadcast %97 : vector<1x8x8xf32> to vector<2x8x8xf32>
    %99 = arith.addf %96, %98 : vector<2x8x8xf32>
    %cst_31 = arith.constant dense<0xFF800000> : vector<2x8xf32>
    %100 = vector.multi_reduction <maximumf>, %99, %cst_31 [2] : vector<2x8x8xf32> to vector<2x8xf32>
    %101 = vector.shape_cast %100 : vector<2x8xf32> to vector<2x8x1xf32>
    %102 = vector.broadcast %101 : vector<2x8x1xf32> to vector<2x8x8xf32>
    %103 = arith.subf %99, %102 : vector<2x8x8xf32>
    %104 = math.exp %103 : vector<2x8x8xf32>
    %cst_32 = arith.constant dense<0.000000e+00> : vector<2x8xf32>
    %105 = vector.multi_reduction <add>, %104, %cst_32 [2] : vector<2x8x8xf32> to vector<2x8xf32>
    %106 = vector.shape_cast %105 : vector<2x8xf32> to vector<2x8x1xf32>
    %107 = tpu.reciprocal %106 {approx = true} : vector<2x8x1xf32> -> vector<2x8x1xf32>
    %108 = vector.broadcast %107 : vector<2x8x1xf32> to vector<2x8x8xf32>
    %109 = arith.mulf %104, %108 : vector<2x8x8xf32>
    %110 = arith.truncf %109 : vector<2x8x8xf32> to vector<2x8x8xbf16>
    "tpu.trace_start"() <{level = 10 : i32, message = "bqk,bkd->bqd"}> : () -> ()
    %cst_33 = arith.constant dense<0.000000e+00> : vector<2x8x8xf32>
    %111 = tpu.matmul %110, %95, %cst_33 {dimension_numbers = #tpu.dot_dimension_numbers<[2], [1], [1], [2], [0, 0, 0, 1, 1, 2], [0], [0]>} : vector<2x8x8xbf16>, vector<2x8x8xbf16>, vector<2x8x8xf32> -> vector<2x8x8xf32>
    "tpu.trace_stop"() : () -> ()
    %112 = vector.extract_strided_slice %42 {offsets = [0, 0, 24], sizes = [2, 8, 8], strides = [1, 1, 1]} : vector<2x8x32xf32> to vector<2x8x8xf32>
    %113 = arith.truncf %112 : vector<2x8x8xf32> to vector<2x8x8xbf16>
    %114 = vector.extract_strided_slice %43 {offsets = [0, 0, 24], sizes = [2, 8, 8], strides = [1, 1, 1]} : vector<2x8x32xf32> to vector<2x8x8xf32>
    %115 = arith.truncf %114 : vector<2x8x8xf32> to vector<2x8x8xbf16>
    %116 = vector.extract_strided_slice %44 {offsets = [0, 0, 24], sizes = [2, 8, 8], strides = [1, 1, 1]} : vector<2x8x32xf32> to vector<2x8x8xf32>
    %117 = arith.truncf %116 : vector<2x8x8xf32> to vector<2x8x8xbf16>
    "tpu.trace_start"() <{level = 10 : i32, message = "bqd,bkd->bqk"}> : () -> ()
    %cst_34 = arith.constant dense<0.000000e+00> : vector<2x8x8xf32>
    %118 = tpu.matmul %113, %115, %cst_34 {dimension_numbers = #tpu.dot_dimension_numbers<[2], [2], [1], [1], [0, 0, 0, 1, 1, 1], [0], [0]>} : vector<2x8x8xbf16>, vector<2x8x8xbf16>, vector<2x8x8xf32> -> vector<2x8x8xf32>
    "tpu.trace_stop"() : () -> ()
    %119 = vector.shape_cast %45 : vector<8x8xf32> to vector<1x8x8xf32>
    %120 = vector.broadcast %119 : vector<1x8x8xf32> to vector<2x8x8xf32>
    %121 = arith.addf %118, %120 : vector<2x8x8xf32>
    %cst_35 = arith.constant dense<0xFF800000> : vector<2x8xf32>
    %122 = vector.multi_reduction <maximumf>, %121, %cst_35 [2] : vector<2x8x8xf32> to vector<2x8xf32>
    %123 = vector.shape_cast %122 : vector<2x8xf32> to vector<2x8x1xf32>
    %124 = vector.broadcast %123 : vector<2x8x1xf32> to vector<2x8x8xf32>
    %125 = arith.subf %121, %124 : vector<2x8x8xf32>
    %126 = math.exp %125 : vector<2x8x8xf32>
    %cst_36 = arith.constant dense<0.000000e+00> : vector<2x8xf32>
    %127 = vector.multi_reduction <add>, %126, %cst_36 [2] : vector<2x8x8xf32> to vector<2x8xf32>
    %128 = vector.shape_cast %127 : vector<2x8xf32> to vector<2x8x1xf32>
    %129 = tpu.reciprocal %128 {approx = true} : vector<2x8x1xf32> -> vector<2x8x1xf32>
    %130 = vector.broadcast %129 : vector<2x8x1xf32> to vector<2x8x8xf32>
    %131 = arith.mulf %126, %130 : vector<2x8x8xf32>
    %132 = arith.truncf %131 : vector<2x8x8xf32> to vector<2x8x8xbf16>
    "tpu.trace_start"() <{level = 10 : i32, message = "bqk,bkd->bqd"}> : () -> ()
    %cst_37 = arith.constant dense<0.000000e+00> : vector<2x8x8xf32>
    %133 = tpu.matmul %132, %117, %cst_37 {dimension_numbers = #tpu.dot_dimension_numbers<[2], [1], [1], [2], [0, 0, 0, 1, 1, 2], [0], [0]>} : vector<2x8x8xbf16>, vector<2x8x8xbf16>, vector<2x8x8xf32> -> vector<2x8x8xf32>
    "tpu.trace_stop"() : () -> ()
    %134 = tpu.concatenate %67, %89, %111, %133 in 2 : vector<2x8x8xf32>, vector<2x8x8xf32>, vector<2x8x8xf32>, vector<2x8x8xf32> -> vector<2x8x32xf32>
    %135 = vector.shape_cast %134 : vector<2x8x32xf32> to vector<16x32xf32>
    %136 = arith.truncf %135 : vector<16x32xf32> to vector<16x32xbf16>
    %c0_38 = arith.constant 0 : index
    %c0_39 = arith.constant 0 : index
    %c0_40 = arith.constant 0 : index
    %137 = vector.load %arg8[%c0_38, %c0_39, %c0_40] : memref<1x32x32xbf16, #tpu.memory_space<vmem>>, vector<1x32x32xbf16>
    %138 = vector.shape_cast %137 : vector<1x32x32xbf16> to vector<32x32xbf16>
    %cst_41 = arith.constant dense<0.000000e+00> : vector<16x32xf32>
    %139 = tpu.matmul %136, %138, %cst_41 {dimension_numbers = #tpu.dot_dimension_numbers<[1], [0], [0], [1], [0, 0, 1, 1], [], []>} : vector<16x32xbf16>, vector<32x32xbf16>, vector<16x32xf32> -> vector<16x32xf32>
    %c0_42 = arith.constant 0 : index
    %c0_43 = arith.constant 0 : index
    %c0_44 = arith.constant 0 : index
    %140 = vector.load %arg9[%c0_42, %c0_43, %c0_44] : memref<1x1x32xf32, #tpu.memory_space<vmem>>, vector<1x1x32xf32>
    %141 = vector.shape_cast %140 : vector<1x1x32xf32> to vector<1x32xf32>
    %142 = vector.broadcast %141 : vector<1x32xf32> to vector<16x32xf32>
    %143 = arith.addf %139, %142 : vector<16x32xf32>
    %144 = vector.shape_cast %143 : vector<16x32xf32> to vector<2x8x32xf32>
    %145 = arith.addf %3, %144 : vector<2x8x32xf32>
    %c0_45 = arith.constant 0 : index
    %c0_46 = arith.constant 0 : index
    %c0_47 = arith.constant 0 : index
    %146 = vector.load %arg10[%c0_45, %c0_46, %c0_47] : memref<1x1x32xf32, #tpu.memory_space<vmem>>, vector<1x1x32xf32>
    %147 = vector.shape_cast %146 : vector<1x1x32xf32> to vector<1x32xf32>
    %c0_48 = arith.constant 0 : index
    %c0_49 = arith.constant 0 : index
    %c0_50 = arith.constant 0 : index
    %148 = vector.load %arg11[%c0_48, %c0_49, %c0_50] : memref<1x1x32xf32, #tpu.memory_space<vmem>>, vector<1x1x32xf32>
    %149 = vector.shape_cast %148 : vector<1x1x32xf32> to vector<1x32xf32>
    %cst_51 = arith.constant dense<0.000000e+00> : vector<2x8xf32>
    %150 = vector.multi_reduction <add>, %145, %cst_51 [2] : vector<2x8x32xf32> to vector<2x8xf32>
    %151 = vector.shape_cast %150 : vector<2x8xf32> to vector<2x8x1xf32>
    %cst_52 = arith.constant 3.200000e+01 : f32
    %152 = vector.broadcast %cst_52 : f32 to vector<2x8x1xf32>
    %153 = arith.divf %151, %152 : vector<2x8x1xf32>
    %154 = vector.broadcast %153 : vector<2x8x1xf32> to vector<2x8x32xf32>
    %155 = arith.subf %145, %154 : vector<2x8x32xf32>
    %156 = arith.mulf %155, %155 : vector<2x8x32xf32>
    %cst_53 = arith.constant dense<0.000000e+00> : vector<2x8xf32>
    %157 = vector.multi_reduction <add>, %156, %cst_53 [2] : vector<2x8x32xf32> to vector<2x8xf32>
    %158 = vector.shape_cast %157 : vector<2x8xf32> to vector<2x8x1xf32>
    %cst_54 = arith.constant 3.200000e+01 : f32
    %159 = vector.broadcast %cst_54 : f32 to vector<2x8x1xf32>
    %160 = arith.divf %158, %159 : vector<2x8x1xf32>
    %161 = vector.broadcast %153 : vector<2x8x1xf32> to vector<2x8x32xf32>
    %162 = arith.subf %145, %161 : vector<2x8x32xf32>
    %cst_55 = arith.constant 9.99999974E-6 : f32
    %163 = vector.broadcast %cst_55 : f32 to vector<2x8x1xf32>
    %164 = arith.addf %160, %163 : vector<2x8x1xf32>
    %165 = math.rsqrt %164 : vector<2x8x1xf32>
    %166 = vector.broadcast %165 : vector<2x8x1xf32> to vector<2x8x32xf32>
    %167 = arith.mulf %162, %166 : vector<2x8x32xf32>
    %168 = vector.shape_cast %147 : vector<1x32xf32> to vector<1x1x32xf32>
    %169 = vector.broadcast %168 : vector<1x1x32xf32> to vector<2x8x32xf32>
    %170 = arith.mulf %167, %169 : vector<2x8x32xf32>
    %171 = vector.shape_cast %149 : vector<1x32xf32> to vector<1x1x32xf32>
    %172 = vector.broadcast %171 : vector<1x1x32xf32> to vector<2x8x32xf32>
    %173 = arith.addf %170, %172 : vector<2x8x32xf32>
    %174 = vector.shape_cast %173 : vector<2x8x32xf32> to vector<16x32xf32>
    %175 = arith.truncf %174 : vector<16x32xf32> to vector<16x32xbf16>
    %c0_56 = arith.constant 0 : index
    %c0_57 = arith.constant 0 : index
    %c0_58 = arith.constant 0 : index
    %176 = vector.load %arg12[%c0_56, %c0_57, %c0_58] : memref<1x32x128xbf16, #tpu.memory_space<vmem>>, vector<1x32x128xbf16>
    %177 = vector.shape_cast %176 : vector<1x32x128xbf16> to vector<32x128xbf16>
    %cst_59 = arith.constant dense<0.000000e+00> : vector<16x128xf32>
    %178 = tpu.matmul %175, %177, %cst_59 {dimension_numbers = #tpu.dot_dimension_numbers<[1], [0], [0], [1], [0, 0, 1, 1], [], []>} : vector<16x32xbf16>, vector<32x128xbf16>, vector<16x128xf32> -> vector<16x128xf32>
    %c0_60 = arith.constant 0 : index
    %c0_61 = arith.constant 0 : index
    %c0_62 = arith.constant 0 : index
    %179 = vector.load %arg13[%c0_60, %c0_61, %c0_62] : memref<1x1x128xf32, #tpu.memory_space<vmem>>, vector<1x1x128xf32>
    %180 = vector.shape_cast %179 : vector<1x1x128xf32> to vector<1x128xf32>
    %181 = vector.broadcast %180 : vector<1x128xf32> to vector<16x128xf32>
    %182 = arith.addf %178, %181 : vector<16x128xf32>
    %cst_63 = arith.constant 1.702000e+00 : f32
    %183 = vector.broadcast %cst_63 : f32 to vector<16x128xf32>
    %184 = arith.mulf %183, %182 : vector<16x128xf32>
    %185 = arith.negf %184 : vector<16x128xf32>
    %186 = math.exp %185 : vector<16x128xf32>
    %cst_64 = arith.constant 1.000000e+00 : f32
    %187 = vector.broadcast %cst_64 : f32 to vector<16x128xf32>
    %188 = arith.addf %187, %186 : vector<16x128xf32>
    %189 = arith.divf %187, %188 : vector<16x128xf32>
    %190 = arith.mulf %182, %189 : vector<16x128xf32>
    %191 = arith.truncf %190 : vector<16x128xf32> to vector<16x128xbf16>
    %c0_65 = arith.constant 0 : index
    %c0_66 = arith.constant 0 : index
    %c0_67 = arith.constant 0 : index
    %192 = vector.load %arg14[%c0_65, %c0_66, %c0_67] : memref<1x128x32xbf16, #tpu.memory_space<vmem>>, vector<1x128x32xbf16>
    %193 = vector.shape_cast %192 : vector<1x128x32xbf16> to vector<128x32xbf16>
    %cst_68 = arith.constant dense<0.000000e+00> : vector<16x32xf32>
    %194 = tpu.matmul %191, %193, %cst_68 {dimension_numbers = #tpu.dot_dimension_numbers<[1], [0], [0], [1], [0, 0, 1, 1], [], []>} : vector<16x128xbf16>, vector<128x32xbf16>, vector<16x32xf32> -> vector<16x32xf32>
    %c0_69 = arith.constant 0 : index
    %c0_70 = arith.constant 0 : index
    %c0_71 = arith.constant 0 : index
    %195 = vector.load %arg15[%c0_69, %c0_70, %c0_71] : memref<1x1x32xf32, #tpu.memory_space<vmem>>, vector<1x1x32xf32>
    %196 = vector.shape_cast %195 : vector<1x1x32xf32> to vector<1x32xf32>
    %197 = vector.broadcast %196 : vector<1x32xf32> to vector<16x32xf32>
    %198 = arith.addf %194, %197 : vector<16x32xf32>
    %199 = vector.shape_cast %198 : vector<16x32xf32> to vector<2x8x32xf32>
    %200 = arith.addf %145, %199 : vector<2x8x32xf32>
    %c0_72 = arith.constant 0 : index
    %c0_73 = arith.constant 0 : index
    %c0_74 = arith.constant 0 : index
    %201 = vector.load %arg20[%c0_72, %c0_73, %c0_74] : memref<2x8x32xf32, #tpu.memory_space<vmem>>, vector<2x8x32xf32>
    tpu.vector_store %arg20[%c0_72, %c0_73, %c0_74], %200 {strides = array<i32>} : memref<2x8x32xf32, #tpu.memory_space<vmem>>, vector<2x8x32xf32>,
    %c1_i32 = arith.constant 1 : i32
    %202 = arith.cmpi eq, %arg0, %c1_i32 : i32
    %203 = arith.extui %202 : i1 to i32
    %c0_i32_75 = arith.constant 0 : i32
    %204 = arith.cmpi ne, %203, %c0_i32_75 : i32
    scf.if %204 {
      %c0_76 = arith.constant 0 : index
      %205 = memref.load %arg1[%c0_76] : memref<2xi32, #tpu.memory_space<smem>>
      %c0_77 = arith.constant 0 : index
      %206 = arith.index_cast %205 : i32 to index
      %c0_78 = arith.constant 0 : index
      %207 = vector.load %arg20[%c0_77, %206, %c0_78] : memref<2x8x32xf32, #tpu.memory_space<vmem>>, vector<1x1x32xf32>
      %208 = vector.shape_cast %207 : vector<1x1x32xf32> to vector<1x32xf32>
      %c1 = arith.constant 1 : index
      %209 = memref.load %arg1[%c1] : memref<2xi32, #tpu.memory_space<smem>>
      %c1_79 = arith.constant 1 : index
      %210 = arith.index_cast %209 : i32 to index
      %c0_80 = arith.constant 0 : index
      %211 = vector.load %arg20[%c1_79, %210, %c0_80] : memref<2x8x32xf32, #tpu.memory_space<vmem>>, vector<1x1x32xf32>
      %212 = vector.shape_cast %211 : vector<1x1x32xf32> to vector<1x32xf32>
      %213 = tpu.concatenate %208, %212 in 0 : vector<1x32xf32>, vector<1x32xf32> -> vector<2x32xf32>
      %c0_81 = arith.constant 0 : index
      %c0_82 = arith.constant 0 : index
      %214 = vector.load %arg16[%c0_81, %c0_82] : memref<1x32xf32, #tpu.memory_space<vmem>>, vector<1x32xf32>
      %c0_83 = arith.constant 0 : index
      %c0_84 = arith.constant 0 : index
      %215 = vector.load %arg17[%c0_83, %c0_84] : memref<1x32xf32, #tpu.memory_space<vmem>>, vector<1x32xf32>
      %cst_85 = arith.constant dense<0.000000e+00> : vector<2xf32>
      %216 = vector.multi_reduction <add>, %213, %cst_85 [1] : vector<2x32xf32> to vector<2xf32>
      %217 = vector.shape_cast %216 : vector<2xf32> to vector<2x1xf32>
      %cst_86 = arith.constant 3.200000e+01 : f32
      %218 = vector.broadcast %cst_86 : f32 to vector<2x1xf32>
      %219 = arith.divf %217, %218 : vector<2x1xf32>
      %220 = vector.broadcast %219 : vector<2x1xf32> to vector<2x32xf32>
      %221 = arith.subf %213, %220 : vector<2x32xf32>
      %222 = arith.mulf %221, %221 : vector<2x32xf32>
      %cst_87 = arith.constant dense<0.000000e+00> : vector<2xf32>
      %223 = vector.multi_reduction <add>, %222, %cst_87 [1] : vector<2x32xf32> to vector<2xf32>
      %224 = vector.shape_cast %223 : vector<2xf32> to vector<2x1xf32>
      %cst_88 = arith.constant 3.200000e+01 : f32
      %225 = vector.broadcast %cst_88 : f32 to vector<2x1xf32>
      %226 = arith.divf %224, %225 : vector<2x1xf32>
      %227 = vector.broadcast %219 : vector<2x1xf32> to vector<2x32xf32>
      %228 = arith.subf %213, %227 : vector<2x32xf32>
      %cst_89 = arith.constant 9.99999974E-6 : f32
      %229 = vector.broadcast %cst_89 : f32 to vector<2x1xf32>
      %230 = arith.addf %226, %229 : vector<2x1xf32>
      %231 = math.rsqrt %230 : vector<2x1xf32>
      %232 = vector.broadcast %231 : vector<2x1xf32> to vector<2x32xf32>
      %233 = arith.mulf %228, %232 : vector<2x32xf32>
      %234 = vector.broadcast %214 : vector<1x32xf32> to vector<2x32xf32>
      %235 = arith.mulf %233, %234 : vector<2x32xf32>
      %236 = vector.broadcast %215 : vector<1x32xf32> to vector<2x32xf32>
      %237 = arith.addf %235, %236 : vector<2x32xf32>
      %238 = arith.truncf %237 : vector<2x32xf32> to vector<2x32xbf16>
      %c0_90 = arith.constant 0 : index
      %c0_91 = arith.constant 0 : index
      %239 = vector.load %arg18[%c0_90, %c0_91] : memref<32x32xbf16, #tpu.memory_space<vmem>>, vector<32x32xbf16>
      %cst_92 = arith.constant dense<0.000000e+00> : vector<2x32xf32>
      %240 = tpu.matmul %238, %239, %cst_92 {dimension_numbers = #tpu.dot_dimension_numbers<[1], [0], [0], [1], [0, 0, 1, 1], [], []>} : vector<2x32xbf16>, vector<32x32xbf16>, vector<2x32xf32> -> vector<2x32xf32>
      %241 = arith.mulf %240, %240 : vector<2x32xf32>
      %cst_93 = arith.constant dense<0.000000e+00> : vector<2xf32>
      %242 = vector.multi_reduction <add>, %241, %cst_93 [1] : vector<2x32xf32> to vector<2xf32>
      %243 = vector.shape_cast %242 : vector<2xf32> to vector<2x1xf32>
      %cst_94 = arith.constant 9.99999996E-13 : f32
      %244 = vector.broadcast %cst_94 : f32 to vector<2x1xf32>
      %245 = arith.addf %243, %244 : vector<2x1xf32>
      %246 = math.rsqrt %245 : vector<2x1xf32>
      %247 = vector.broadcast %246 : vector<2x1xf32> to vector<2x32xf32>
      %248 = arith.mulf %240, %247 : vector<2x32xf32>
      %c0_95 = arith.constant 0 : index
      %c0_96 = arith.constant 0 : index
      %249 = vector.load %arg19[%c0_95, %c0_96] : memref<2x32xf32, #tpu.memory_space<vmem>>, vector<2x32xf32>
      tpu.vector_store %arg19[%c0_95, %c0_96], %248 {strides = array<i32>} : memref<2x32xf32, #tpu.memory_space<vmem>>, vector<2x32xf32>,
    } else {
    }
    return
  }
  func.func @transform_0(%arg0: i32, %arg1: memref<2xi32, #tpu.memory_space<smem>>) -> (i32, i32, i32) {
    %c0_i32 = arith.constant 0 : i32
    %c0_i32_0 = arith.constant 0 : i32
    %c0_i32_1 = arith.constant 0 : i32
    %c0_i32_2 = arith.constant 0 : i32
    return %c0_i32, %c0_i32_0, %c0_i32_1 : i32, i32, i32
  }
  func.func @transform_1(%arg0: i32, %arg1: memref<2xi32, #tpu.memory_space<smem>>) -> (i32, i32) {
    %c0_i32 = arith.constant 0 : i32
    %c0_i32_0 = arith.constant 0 : i32
    %c0_i32_1 = arith.constant 0 : i32
    return %c0_i32, %c0_i32_0 : i32, i32
  }
  func.func @transform_2(%arg0: i32, %arg1: memref<2xi32, #tpu.memory_space<smem>>) -> (i32, i32, i32) {
    %c0_i32 = arith.constant 0 : i32
    %c0_i32_0 = arith.constant 0 : i32
    %c0_i32_1 = arith.constant 0 : i32
    return %arg0, %c0_i32, %c0_i32_0 : i32, i32, i32
  }
  func.func @transform_3(%arg0: i32, %arg1: memref<2xi32, #tpu.memory_space<smem>>) -> (i32, i32, i32) {
    %c0_i32 = arith.constant 0 : i32
    %c0_i32_0 = arith.constant 0 : i32
    %c0_i32_1 = arith.constant 0 : i32
    return %arg0, %c0_i32, %c0_i32_0 : i32, i32, i32
  }
  func.func @transform_4(%arg0: i32, %arg1: memref<2xi32, #tpu.memory_space<smem>>) -> (i32, i32, i32) {
    %c0_i32 = arith.constant 0 : i32
    %c0_i32_0 = arith.constant 0 : i32
    %c0_i32_1 = arith.constant 0 : i32
    return %arg0, %c0_i32, %c0_i32_0 : i32, i32, i32
  }
  func.func @transform_5(%arg0: i32, %arg1: memref<2xi32, #tpu.memory_space<smem>>) -> (i32, i32, i32) {
    %c0_i32 = arith.constant 0 : i32
    %c0_i32_0 = arith.constant 0 : i32
    %c0_i32_1 = arith.constant 0 : i32
    return %arg0, %c0_i32, %c0_i32_0 : i32, i32, i32
  }
  func.func @transform_6(%arg0: i32, %arg1: memref<2xi32, #tpu.memory_space<smem>>) -> (i32, i32, i32) {
    %c0_i32 = arith.constant 0 : i32
    %c0_i32_0 = arith.constant 0 : i32
    %c0_i32_1 = arith.constant 0 : i32
    return %arg0, %c0_i32, %c0_i32_0 : i32, i32, i32
  }
  func.func @transform_7(%arg0: i32, %arg1: memref<2xi32, #tpu.memory_space<smem>>) -> (i32, i32, i32) {
    %c0_i32 = arith.constant 0 : i32
    %c0_i32_0 = arith.constant 0 : i32
    %c0_i32_1 = arith.constant 0 : i32
    return %arg0, %c0_i32, %c0_i32_0 : i32, i32, i32
  }
  func.func @transform_8(%arg0: i32, %arg1: memref<2xi32, #tpu.memory_space<smem>>) -> (i32, i32, i32) {
    %c0_i32 = arith.constant 0 : i32
    %c0_i32_0 = arith.constant 0 : i32
    %c0_i32_1 = arith.constant 0 : i32
    return %arg0, %c0_i32, %c0_i32_0 : i32, i32, i32
  }
  func.func @transform_9(%arg0: i32, %arg1: memref<2xi32, #tpu.memory_space<smem>>) -> (i32, i32, i32) {
    %c0_i32 = arith.constant 0 : i32
    %c0_i32_0 = arith.constant 0 : i32
    %c0_i32_1 = arith.constant 0 : i32
    return %arg0, %c0_i32, %c0_i32_0 : i32, i32, i32
  }
  func.func @transform_10(%arg0: i32, %arg1: memref<2xi32, #tpu.memory_space<smem>>) -> (i32, i32, i32) {
    %c0_i32 = arith.constant 0 : i32
    %c0_i32_0 = arith.constant 0 : i32
    %c0_i32_1 = arith.constant 0 : i32
    return %arg0, %c0_i32, %c0_i32_0 : i32, i32, i32
  }
  func.func @transform_11(%arg0: i32, %arg1: memref<2xi32, #tpu.memory_space<smem>>) -> (i32, i32, i32) {
    %c0_i32 = arith.constant 0 : i32
    %c0_i32_0 = arith.constant 0 : i32
    %c0_i32_1 = arith.constant 0 : i32
    return %arg0, %c0_i32, %c0_i32_0 : i32, i32, i32
  }
  func.func @transform_12(%arg0: i32, %arg1: memref<2xi32, #tpu.memory_space<smem>>) -> (i32, i32, i32) {
    %c0_i32 = arith.constant 0 : i32
    %c0_i32_0 = arith.constant 0 : i32
    %c0_i32_1 = arith.constant 0 : i32
    return %arg0, %c0_i32, %c0_i32_0 : i32, i32, i32
  }
  func.func @transform_13(%arg0: i32, %arg1: memref<2xi32, #tpu.memory_space<smem>>) -> (i32, i32, i32) {
    %c0_i32 = arith.constant 0 : i32
    %c0_i32_0 = arith.constant 0 : i32
    %c0_i32_1 = arith.constant 0 : i32
    return %arg0, %c0_i32, %c0_i32_0 : i32, i32, i32
  }
  func.func @transform_14(%arg0: i32, %arg1: memref<2xi32, #tpu.memory_space<smem>>) -> (i32, i32) {
    %c0_i32 = arith.constant 0 : i32
    %c0_i32_0 = arith.constant 0 : i32
    %c0_i32_1 = arith.constant 0 : i32
    return %c0_i32, %c0_i32_0 : i32, i32
  }
  func.func @transform_15(%arg0: i32, %arg1: memref<2xi32, #tpu.memory_space<smem>>) -> (i32, i32) {
    %c0_i32 = arith.constant 0 : i32
    %c0_i32_0 = arith.constant 0 : i32
    %c0_i32_1 = arith.constant 0 : i32
    return %c0_i32, %c0_i32_0 : i32, i32
  }
  func.func @transform_16(%arg0: i32, %arg1: memref<2xi32, #tpu.memory_space<smem>>) -> (i32, i32) {
    %c0_i32 = arith.constant 0 : i32
    %c0_i32_0 = arith.constant 0 : i32
    %c0_i32_1 = arith.constant 0 : i32
    return %c0_i32, %c0_i32_0 : i32, i32
  }
  func.func @transform_17(%arg0: i32, %arg1: memref<2xi32, #tpu.memory_space<smem>>) -> (i32, i32) {
    %c0_i32 = arith.constant 0 : i32
    %c0_i32_0 = arith.constant 0 : i32
    %c0_i32_1 = arith.constant 0 : i32
    return %c0_i32, %c0_i32_0 : i32, i32
  }
}

</mosaic_0001>

<llo_original>
// kernel: tpu_custom_call.1
$region0: #{tpu_custom_call.1}
  #allocation0 [shape = 'u32[]', space=smem, size = 0x4, offset = 0x4, fixed_abs, tag = 'smem constant byte address 0x4 - core index']
  #allocation1 [shape = 'u32[144,128]{1,0:T(1,128)}', space=vmem, size = 0x12000, scoped, tag = 'internal scratch']
  #allocation2 [shape = 'f32[2,8,32]{2,1,0:T(8,128)}', space=vmem, size = 0x2000, scoped, tag = 'scratch operand']
  #allocation3 [shape = 's32[1]{0}', space=sflag, size = 0x4, scoped, tag = 'scoped memory for tpu_custom_call.1']
  #allocation4 [shape = 'u8[512]{0}', space=smem, size = 0x200, scoped, tag = 'prefetched SMEM operand 0']
  %s0 = inlined_call_operand.vmem [shape: s32[2], index: 0, kind: input, shape index: {}]
  %s1 = inlined_call_operand.vmem [shape: f32[2,8,32], index: 1, kind: input, shape index: {}]
  %s2 = inlined_call_operand.vmem [shape: f32[8,8], index: 2, kind: input, shape index: {}]
  %s3 = inlined_call_operand.vmem [shape: f32[2,1,32], index: 3, kind: input, shape index: {}]
  %s4 = inlined_call_operand.vmem [shape: f32[2,1,32], index: 4, kind: input, shape index: {}]
  %s5 = inlined_call_operand.vmem [shape: bf16[2,32,96], index: 5, kind: input, shape index: {}]
  %s6 = inlined_call_operand.vmem [shape: f32[2,1,96], index: 6, kind: input, shape index: {}]
  %s7 = inlined_call_operand.vmem [shape: bf16[2,32,32], index: 7, kind: input, shape index: {}]
  %s8 = inlined_call_operand.vmem [shape: f32[2,1,32], index: 8, kind: input, shape index: {}]
  %s9 = inlined_call_operand.vmem [shape: f32[2,1,32], index: 9, kind: input, shape index: {}]
  %s10 = inlined_call_operand.vmem [shape: f32[2,1,32], index: 10, kind: input, shape index: {}]
  %s11 = inlined_call_operand.vmem [shape: bf16[2,32,128], index: 11, kind: input, shape index: {}]
  %s12 = inlined_call_operand.vmem [shape: f32[2,1,128], index: 12, kind: input, shape index: {}]
  %s13 = inlined_call_operand.vmem [shape: bf16[2,128,32], index: 13, kind: input, shape index: {}]
  %s14 = inlined_call_operand.vmem [shape: f32[2,1,32], index: 14, kind: input, shape index: {}]
  %s15 = inlined_call_operand.vmem [shape: f32[1,32], index: 15, kind: input, shape index: {}]
  %s16 = inlined_call_operand.vmem [shape: f32[1,32], index: 16, kind: input, shape index: {}]
  %s17 = inlined_call_operand.vmem [shape: bf16[32,32], index: 17, kind: input, shape index: {}]
  %s18 = inlined_call_operand.hbm [shape: f32[2,32], index: 18, kind: output, shape index: {}]
  %s19 = sld [smem:[#allocation0]]
  $region109: #{tpu_custom_call.1} parent=0
    _
  %s21 = ssub.s32 1, %s19
  %s22 = scalar_select 0, %s21, %s19
  %s23 = sshll.u32 %s0, 4
  %s24 = int_to_ptr.vmem [resolvable:$true] %s23
  %26 = dma.vmem_to_smem %s24, 16, [#allocation4], [#allocation3]
  %27 = dma.done [#allocation3], 16
  %28 = sfence
  $region1: #{tpu_custom_call.1} parent=0
    #allocation5 [shape = 'u8[1024]{0}', space=vmem, size = 0x400, scoped, tag = 'output window, operand 0, single buffered']
    #allocation6 [shape = 's32[2]{0}', space=sflag, size = 0x8, scoped, tag = 'scoped memory for tpu_custom_call.1']
    %29 = vsyncpa [#allocation6], 0
    loop: start=0, step=1, limit=4
    $region2: #{tpu_custom_call.1} parent=1 // loop_pre_header
      _
    $region3: #{tpu_custom_call.1} parent=1 // loop_header
      %s31 = sphi 0, %s35
      %p32 = scmp.ge.s32.totalorder %s31, 4
      %s39 = sphi 0, %s39
      %s41 = sphi 0, %s39
      %s42 = sphi 0, %s41
      %s56 = sphi 0, %s42
      %s60 = sphi 0, %s60
      %s62 = sphi 0, %s60
      %s63 = sphi 0, %s62
      %s77 = sphi 0, %s63
      %s83 = sphi 0, %s85
      %s86 = sphi 0, %s83
      %s87 = sphi 0, %s86
      %s103 = sphi 0, %s87
      %s109 = sphi 0, %s111
      %s112 = sphi 0, %s109
      %s113 = sphi 0, %s112
      %s129 = sphi 0, %s113
      %s135 = sphi 0, %s137
      %s138 = sphi 0, %s135
      %s139 = sphi 0, %s138
      %s155 = sphi 0, %s139
      %s161 = sphi 0, %s163
      %s164 = sphi 0, %s161
      %s165 = sphi 0, %s164
      %s181 = sphi 0, %s165
      %s187 = sphi 0, %s189
      %s190 = sphi 0, %s187
      %s191 = sphi 0, %s190
      %s207 = sphi 0, %s191
      %s213 = sphi 0, %s215
      %s216 = sphi 0, %s213
      %s217 = sphi 0, %s216
      %s233 = sphi 0, %s217
      %s239 = sphi 0, %s241
      %s242 = sphi 0, %s239
      %s243 = sphi 0, %s242
      %s259 = sphi 0, %s243
      %s265 = sphi 0, %s267
      %s268 = sphi 0, %s265
      %s269 = sphi 0, %s268
      %s285 = sphi 0, %s269
      %s291 = sphi 0, %s293
      %s294 = sphi 0, %s291
      %s295 = sphi 0, %s294
      %s311 = sphi 0, %s295
      %s317 = sphi 0, %s319
      %s320 = sphi 0, %s317
      %s321 = sphi 0, %s320
      %s337 = sphi 0, %s321
      %s343 = sphi 0, %s345
      %s346 = sphi 0, %s343
      %s347 = sphi 0, %s346
      %s363 = sphi 0, %s347
      %s369 = sphi 0, %s371
      %s372 = sphi 0, %s369
      %s373 = sphi 0, %s372
      %s389 = sphi 0, %s373
      %s393 = sphi 0, %s393
      %s395 = sphi 0, %s393
      %s396 = sphi 0, %s395
      %s410 = sphi 0, %s396
      %s414 = sphi 0, %s414
      %s416 = sphi 0, %s414
      %s417 = sphi 0, %s416
      %s431 = sphi 0, %s417
      %s435 = sphi 0, %s435
      %s437 = sphi 0, %s435
      %s438 = sphi 0, %s437
      %s452 = sphi 0, %s438
      %s456 = sphi 0, %s456
      %s458 = sphi 0, %s456
      %s459 = sphi 0, %s458
      %s473 = sphi 0, %s459
    $region4: #{tpu_custom_call.1} parent=1 // loop_header_branch
      %34 = sbr.rel (%p32) target = $region8
    $region5: #{tpu_custom_call.1} parent=1 // loop_body
      %s36 = ssub.s32 %s31, 1
      %s37 = ssub.s32 %s31, 2
      %s38 = sadd.s32 %s31, 1
      %s40 = sadd.s32 %s39, 1
      %p43 = scmp.eq.s32.totalorder %s31, 1
      %p44 = scmp.ne.s32.totalorder %s39, %s41
      %p45 = scmp.eq.s32.totalorder %s31, 0
      %p46 = por %p44, %p45
      %p47 = scmp.ne.s32.totalorder %s39, %s41
      %p48 = scmp.eq.s32.totalorder %s36, 1
      %p49 = por %p47, %p48
      %p50 = scmp.ne.s32.totalorder %s41, %s42
      %p51 = scmp.eq.s32.totalorder %s36, 0
      %p52 = por %p50, %p51
      %p53 = scmp.ne.s32.totalorder %s41, %s42
      %p54 = scmp.eq.s32.totalorder %s37, 1
      %p55 = por %p53, %p54
      %p57 = scmp.ne.s32.totalorder %s42, %s56
      %p58 = scmp.eq.s32.totalorder %s37, 0
      %p59 = por %p57, %p58
      %s61 = sadd.s32 %s60, 1
      %p64 = scmp.eq.s32.totalorder %s31, 1
      %p65 = scmp.ne.s32.totalorder %s60, %s62
      %p66 = scmp.eq.s32.totalorder %s31, 0
      %p67 = por %p65, %p66
      %p68 = scmp.ne.s32.totalorder %s60, %s62
      %p69 = scmp.eq.s32.totalorder %s36, 1
      %p70 = por %p68, %p69
      %p71 = scmp.ne.s32.totalorder %s62, %s63
      %p72 = scmp.eq.s32.totalorder %s36, 0
      %p73 = por %p71, %p72
      %p74 = scmp.ne.s32.totalorder %s62, %s63
      %p75 = scmp.eq.s32.totalorder %s37, 1
      %p76 = por %p74, %p75
      %p78 = scmp.ne.s32.totalorder %s63, %s77
      %p79 = scmp.eq.s32.totalorder %s37, 0
      %p80 = por %p78, %p79
      %s81 = ssub.s32 %s31, %s38
      %p82 = scmp.eq.s32.totalorder %s81, 0
      %s84 = sadd.s32 %s83, 1
      %s85 = scalar_select %p82, %s83, %s84
      %p88 = pneg %p82
      %p89 = scmp.eq.s32.totalorder %s31, 1
      %p90 = por %p88, %p89
      %p91 = scmp.ne.s32.totalorder %s83, %s86
      %p92 = scmp.eq.s32.totalorder %s31, 0
      %p93 = por %p91, %p92
      %p94 = scmp.ne.s32.totalorder %s83, %s86
      %p95 = scmp.eq.s32.totalorder %s36, 1
      %p96 = por %p94, %p95
      %p97 = scmp.ne.s32.totalorder %s86, %s87
      %p98 = scmp.eq.s32.totalorder %s36, 0
      %p99 = por %p97, %p98
      %p100 = scmp.ne.s32.totalorder %s86, %s87
      %p101 = scmp.eq.s32.totalorder %s37, 1
      %p102 = por %p100, %p101
      %p104 = scmp.ne.s32.totalorder %s87, %s103
      %p105 = scmp.eq.s32.totalorder %s37, 0
      %p106 = por %p104, %p105
      %s107 = ssub.s32 %s31, %s38
      %p108 = scmp.eq.s32.totalorder %s107, 0
      %s110 = sadd.s32 %s109, 1
      %s111 = scalar_select %p108, %s109, %s110
      %p114 = pneg %p108
      %p115 = scmp.eq.s32.totalorder %s31, 1
      %p116 = por %p114, %p115
      %p117 = scmp.ne.s32.totalorder %s109, %s112
      %p118 = scmp.eq.s32.totalorder %s31, 0
      %p119 = por %p117, %p118
      %p120 = scmp.ne.s32.totalorder %s109, %s112
      %p121 = scmp.eq.s32.totalorder %s36, 1
      %p122 = por %p120, %p121
      %p123 = scmp.ne.s32.totalorder %s112, %s113
      %p124 = scmp.eq.s32.totalorder %s36, 0
      %p125 = por %p123, %p124
      %p126 = scmp.ne.s32.totalorder %s112, %s113
      %p127 = scmp.eq.s32.totalorder %s37, 1
      %p128 = por %p126, %p127
      %p130 = scmp.ne.s32.totalorder %s113, %s129
      %p131 = scmp.eq.s32.totalorder %s37, 0
      %p132 = por %p130, %p131
      %s133 = ssub.s32 %s31, %s38
      %p134 = scmp.eq.s32.totalorder %s133, 0
      %s136 = sadd.s32 %s135, 1
      %s137 = scalar_select %p134, %s135, %s136
      %p140 = pneg %p134
      %p141 = scmp.eq.s32.totalorder %s31, 1
      %p142 = por %p140, %p141
      %p143 = scmp.ne.s32.totalorder %s135, %s138
      %p144 = scmp.eq.s32.totalorder %s31, 0
      %p145 = por %p143, %p144
      %p146 = scmp.ne.s32.totalorder %s135, %s138
      %p147 = scmp.eq.s32.totalorder %s36, 1
      %p148 = por %p146, %p147
      %p149 = scmp.ne.s32.totalorder %s138, %s139
      %p150 = scmp.eq.s32.totalorder %s36, 0
      %p151 = por %p149, %p150
      %p152 = scmp.ne.s32.totalorder %s138, %s139
      %p153 = scmp.eq.s32.totalorder %s37, 1
      %p154 = por %p152, %p153
      %p156 = scmp.ne.s32.totalorder %s139, %s155
      %p157 = scmp.eq.s32.totalorder %s37, 0
      %p158 = por %p156, %p157
      %s159 = ssub.s32 %s31, %s38
      %p160 = scmp.eq.s32.totalorder %s159, 0
      %s162 = sadd.s32 %s161, 1
      %s163 = scalar_select %p160, %s161, %s162
      %p166 = pneg %p160
      %p167 = scmp.eq.s32.totalorder %s31, 1
      %p168 = por %p166, %p167
      %p169 = scmp.ne.s32.totalorder %s161, %s164
      %p170 = scmp.eq.s32.totalorder %s31, 0
      %p171 = por %p169, %p170
      %p172 = scmp.ne.s32.totalorder %s161, %s164
      %p173 = scmp.eq.s32.totalorder %s36, 1
      %p174 = por %p172, %p173
      %p175 = scmp.ne.s32.totalorder %s164, %s165
      %p176 = scmp.eq.s32.totalorder %s36, 0
      %p177 = por %p175, %p176
      %p178 = scmp.ne.s32.totalorder %s164, %s165
      %p179 = scmp.eq.s32.totalorder %s37, 1
      %p180 = por %p178, %p179
      %p182 = scmp.ne.s32.totalorder %s165, %s181
      %p183 = scmp.eq.s32.totalorder %s37, 0
      %p184 = por %p182, %p183
      %s185 = ssub.s32 %s31, %s38
      %p186 = scmp.eq.s32.totalorder %s185, 0
      %s188 = sadd.s32 %s187, 1
      %s189 = scalar_select %p186, %s187, %s188
      %p192 = pneg %p186
      %p193 = scmp.eq.s32.totalorder %s31, 1
      %p194 = por %p192, %p193
      %p195 = scmp.ne.s32.totalorder %s187, %s190
      %p196 = scmp.eq.s32.totalorder %s31, 0
      %p197 = por %p195, %p196
      %p198 = scmp.ne.s32.totalorder %s187, %s190
      %p199 = scmp.eq.s32.totalorder %s36, 1
      %p200 = por %p198, %p199
      %p201 = scmp.ne.s32.totalorder %s190, %s191
      %p202 = scmp.eq.s32.totalorder %s36, 0
      %p203 = por %p201, %p202
      %p204 = scmp.ne.s32.totalorder %s190, %s191
      %p205 = scmp.eq.s32.totalorder %s37, 1
      %p206 = por %p204, %p205
      %p208 = scmp.ne.s32.totalorder %s191, %s207
      %p209 = scmp.eq.s32.totalorder %s37, 0
      %p210 = por %p208, %p209
      %s211 = ssub.s32 %s31, %s38
      %p212 = scmp.eq.s32.totalorder %s211, 0
      %s214 = sadd.s32 %s213, 1
      %s215 = scalar_select %p212, %s213, %s214
      %p218 = pneg %p212
      %p219 = scmp.eq.s32.totalorder %s31, 1
      %p220 = por %p218, %p219
      %p221 = scmp.ne.s32.totalorder %s213, %s216
      %p222 = scmp.eq.s32.totalorder %s31, 0
      %p223 = por %p221, %p222
      %p224 = scmp.ne.s32.totalorder %s213, %s216
      %p225 = scmp.eq.s32.totalorder %s36, 1
      %p226 = por %p224, %p225
      %p227 = scmp.ne.s32.totalorder %s216, %s217
      %p228 = scmp.eq.s32.totalorder %s36, 0
      %p229 = por %p227, %p228
      %p230 = scmp.ne.s32.totalorder %s216, %s217
      %p231 = scmp.eq.s32.totalorder %s37, 1
      %p232 = por %p230, %p231
      %p234 = scmp.ne.s32.totalorder %s217, %s233
      %p235 = scmp.eq.s32.totalorder %s37, 0
      %p236 = por %p234, %p235
      %s237 = ssub.s32 %s31, %s38
      %p238 = scmp.eq.s32.totalorder %s237, 0
      %s240 = sadd.s32 %s239, 1
      %s241 = scalar_select %p238, %s239, %s240
      %p244 = pneg %p238
      %p245 = scmp.eq.s32.totalorder %s31, 1
      %p246 = por %p244, %p245
      %p247 = scmp.ne.s32.totalorder %s239, %s242
      %p248 = scmp.eq.s32.totalorder %s31, 0
      %p249 = por %p247, %p248
      %p250 = scmp.ne.s32.totalorder %s239, %s242
      %p251 = scmp.eq.s32.totalorder %s36, 1
      %p252 = por %p250, %p251
      %p253 = scmp.ne.s32.totalorder %s242, %s243
      %p254 = scmp.eq.s32.totalorder %s36, 0
      %p255 = por %p253, %p254
      %p256 = scmp.ne.s32.totalorder %s242, %s243
      %p257 = scmp.eq.s32.totalorder %s37, 1
      %p258 = por %p256, %p257
      %p260 = scmp.ne.s32.totalorder %s243, %s259
      %p261 = scmp.eq.s32.totalorder %s37, 0
      %p262 = por %p260, %p261
      %s263 = ssub.s32 %s31, %s38
      %p264 = scmp.eq.s32.totalorder %s263, 0
      %s266 = sadd.s32 %s265, 1
      %s267 = scalar_select %p264, %s265, %s266
      %p270 = pneg %p264
      %p271 = scmp.eq.s32.totalorder %s31, 1
      %p272 = por %p270, %p271
      %p273 = scmp.ne.s32.totalorder %s265, %s268
      %p274 = scmp.eq.s32.totalorder %s31, 0
      %p275 = por %p273, %p274
      %p276 = scmp.ne.s32.totalorder %s265, %s268
      %p277 = scmp.eq.s32.totalorder %s36, 1
      %p278 = por %p276, %p277
      %p279 = scmp.ne.s32.totalorder %s268, %s269
      %p280 = scmp.eq.s32.totalorder %s36, 0
      %p281 = por %p279, %p280
      %p282 = scmp.ne.s32.totalorder %s268, %s269
      %p283 = scmp.eq.s32.totalorder %s37, 1
      %p284 = por %p282, %p283
      %p286 = scmp.ne.s32.totalorder %s269, %s285
      %p287 = scmp.eq.s32.totalorder %s37, 0
      %p288 = por %p286, %p287
      %s289 = ssub.s32 %s31, %s38
      %p290 = scmp.eq.s32.totalorder %s289, 0
      %s292 = sadd.s32 %s291, 1
      %s293 = scalar_select %p290, %s291, %s292
      %p296 = pneg %p290
      %p297 = scmp.eq.s32.totalorder %s31, 1
      %p298 = por %p296, %p297
      %p299 = scmp.ne.s32.totalorder %s291, %s294
      %p300 = scmp.eq.s32.totalorder %s31, 0
      %p301 = por %p299, %p300
      %p302 = scmp.ne.s32.totalorder %s291, %s294
      %p303 = scmp.eq.s32.totalorder %s36, 1
      %p304 = por %p302, %p303
      %p305 = scmp.ne.s32.totalorder %s294, %s295
      %p306 = scmp.eq.s32.totalorder %s36, 0
      %p307 = por %p305, %p306
      %p308 = scmp.ne.s32.totalorder %s294, %s295
      %p309 = scmp.eq.s32.totalorder %s37, 1
      %p310 = por %p308, %p309
      %p312 = scmp.ne.s32.totalorder %s295, %s311
      %p313 = scmp.eq.s32.totalorder %s37, 0
      %p314 = por %p312, %p313
      %s315 = ssub.s32 %s31, %s38
      %p316 = scmp.eq.s32.totalorder %s315, 0
      %s318 = sadd.s32 %s317, 1
      %s319 = scalar_select %p316, %s317, %s318
      %p322 = pneg %p316
      %p323 = scmp.eq.s32.totalorder %s31, 1
      %p324 = por %p322, %p323
      %p325 = scmp.ne.s32.totalorder %s317, %s320
      %p326 = scmp.eq.s32.totalorder %s31, 0
      %p327 = por %p325, %p326
      %p328 = scmp.ne.s32.totalorder %s317, %s320
      %p329 = scmp.eq.s32.totalorder %s36, 1
      %p330 = por %p328, %p329
      %p331 = scmp.ne.s32.totalorder %s320, %s321
      %p332 = scmp.eq.s32.totalorder %s36, 0
      %p333 = por %p331, %p332
      %p334 = scmp.ne.s32.totalorder %s320, %s321
      %p335 = scmp.eq.s32.totalorder %s37, 1
      %p336 = por %p334, %p335
      %p338 = scmp.ne.s32.totalorder %s321, %s337
      %p339 = scmp.eq.s32.totalorder %s37, 0
      %p340 = por %p338, %p339
      %s341 = ssub.s32 %s31, %s38
      %p342 = scmp.eq.s32.totalorder %s341, 0
      %s344 = sadd.s32 %s343, 1
      %s345 = scalar_select %p342, %s343, %s344
      %p348 = pneg %p342
      %p349 = scmp.eq.s32.totalorder %s31, 1
      %p350 = por %p348, %p349
      %p351 = scmp.ne.s32.totalorder %s343, %s346
      %p352 = scmp.eq.s32.totalorder %s31, 0
      %p353 = por %p351, %p352
      %p354 = scmp.ne.s32.totalorder %s343, %s346
      %p355 = scmp.eq.s32.totalorder %s36, 1
      %p356 = por %p354, %p355
      %p357 = scmp.ne.s32.totalorder %s346, %s347
      %p358 = scmp.eq.s32.totalorder %s36, 0
      %p359 = por %p357, %p358
      %p360 = scmp.ne.s32.totalorder %s346, %s347
      %p361 = scmp.eq.s32.totalorder %s37, 1
      %p362 = por %p360, %p361
      %p364 = scmp.ne.s32.totalorder %s347, %s363
      %p365 = scmp.eq.s32.totalorder %s37, 0
      %p366 = por %p364, %p365
      %s367 = ssub.s32 %s31, %s38
      %p368 = scmp.eq.s32.totalorder %s367, 0
      %s370 = sadd.s32 %s369, 1
      %s371 = scalar_select %p368, %s369, %s370
      %p374 = pneg %p368
      %p375 = scmp.eq.s32.totalorder %s31, 1
      %p376 = por %p374, %p375
      %p377 = scmp.ne.s32.totalorder %s369, %s372
      %p378 = scmp.eq.s32.totalorder %s31, 0
      %p379 = por %p377, %p378
      %p380 = scmp.ne.s32.totalorder %s369, %s372
      %p381 = scmp.eq.s32.totalorder %s36, 1
      %p382 = por %p380, %p381
      %p383 = scmp.ne.s32.totalorder %s372, %s373
      %p384 = scmp.eq.s32.totalorder %s36, 0
      %p385 = por %p383, %p384
      %p386 = scmp.ne.s32.totalorder %s372, %s373
      %p387 = scmp.eq.s32.totalorder %s37, 1
      %p388 = por %p386, %p387
      %p390 = scmp.ne.s32.totalorder %s373, %s389
      %p391 = scmp.eq.s32.totalorder %s37, 0
      %p392 = por %p390, %p391
      %s394 = sadd.s32 %s393, 1
      %p397 = scmp.eq.s32.totalorder %s31, 1
      %p398 = scmp.ne.s32.totalorder %s393, %s395
      %p399 = scmp.eq.s32.totalorder %s31, 0
      %p400 = por %p398, %p399
      %p401 = scmp.ne.s32.totalorder %s393, %s395
      %p402 = scmp.eq.s32.totalorder %s36, 1
      %p403 = por %p401, %p402
      %p404 = scmp.ne.s32.totalorder %s395, %s396
      %p405 = scmp.eq.s32.totalorder %s36, 0
      %p406 = por %p404, %p405
      %p407 = scmp.ne.s32.totalorder %s395, %s396
      %p408 = scmp.eq.s32.totalorder %s37, 1
      %p409 = por %p407, %p408
      %p411 = scmp.ne.s32.totalorder %s396, %s410
      %p412 = scmp.eq.s32.totalorder %s37, 0
      %p413 = por %p411, %p412
      %s415 = sadd.s32 %s414, 1
      %p418 = scmp.eq.s32.totalorder %s31, 1
      %p419 = scmp.ne.s32.totalorder %s414, %s416
      %p420 = scmp.eq.s32.totalorder %s31, 0
      %p421 = por %p419, %p420
      %p422 = scmp.ne.s32.totalorder %s414, %s416
      %p423 = scmp.eq.s32.totalorder %s36, 1
      %p424 = por %p422, %p423
      %p425 = scmp.ne.s32.totalorder %s416, %s417
      %p426 = scmp.eq.s32.totalorder %s36, 0
      %p427 = por %p425, %p426
      %p428 = scmp.ne.s32.totalorder %s416, %s417
      %p429 = scmp.eq.s32.totalorder %s37, 1
      %p430 = por %p428, %p429
      %p432 = scmp.ne.s32.totalorder %s417, %s431
      %p433 = scmp.eq.s32.totalorder %s37, 0
      %p434 = por %p432, %p433
      %s436 = sadd.s32 %s435, 1
      %p439 = scmp.eq.s32.totalorder %s31, 1
      %p440 = scmp.ne.s32.totalorder %s435, %s437
      %p441 = scmp.eq.s32.totalorder %s31, 0
      %p442 = por %p440, %p441
      %p443 = scmp.ne.s32.totalorder %s435, %s437
      %p444 = scmp.eq.s32.totalorder %s36, 1
      %p445 = por %p443, %p444
      %p446 = scmp.ne.s32.totalorder %s437, %s438
      %p447 = scmp.eq.s32.totalorder %s36, 0
      %p448 = por %p446, %p447
      %p449 = scmp.ne.s32.totalorder %s437, %s438
      %p450 = scmp.eq.s32.totalorder %s37, 1
      %p451 = por %p449, %p450
      %p453 = scmp.ne.s32.totalorder %s438, %s452
      %p454 = scmp.eq.s32.totalorder %s37, 0
      %p455 = por %p453, %p454
      %s457 = sadd.s32 %s456, 1
      %p460 = scmp.eq.s32.totalorder %s31, 1
      %p461 = scmp.ne.s32.totalorder %s456, %s458
      %p462 = scmp.eq.s32.totalorder %s31, 0
      %p463 = por %p461, %p462
      %p464 = scmp.ne.s32.totalorder %s456, %s458
      %p465 = scmp.eq.s32.totalorder %s36, 1
      %p466 = por %p464, %p465
      %p467 = scmp.ne.s32.totalorder %s458, %s459
      %p468 = scmp.eq.s32.totalorder %s36, 0
      %p469 = por %p467, %p468
      %p470 = scmp.ne.s32.totalorder %s458, %s459
      %p471 = scmp.eq.s32.totalorder %s37, 1
      %p472 = por %p470, %p471
      %p474 = scmp.ne.s32.totalorder %s459, %s473
      %p475 = scmp.eq.s32.totalorder %s37, 0
      %p476 = por %p474, %p475
      %p477 = scmp.le.s32.totalorder 1, %s31
      %p478 = scmp.lt.s32.totalorder %s31, 3
      %p479 = pnand %p477, %p478
      %p480 = pneg %p479
      // Predicated region
      $region9: #{tpu_custom_call.1} parent=5 // pred_check
        _
      $region10: #{tpu_custom_call.1} parent=5 // pred_check_branch
        %482 = sbr.rel (%p479) target = $region12
      $region11: #{tpu_custom_call.1} parent=5 // pred_region
        %s483 = ssub.s32 %s31, 1
        // Predicated region
        $region13: #{tpu_custom_call.1} parent=11 // pred_check
          %p484 = pneg %p52
        $region14: #{tpu_custom_call.1} parent=11 // pred_check_branch
          %486 = sbr.rel (%p484) target = $region16
        $region15: #{tpu_custom_call.1} parent=11 // pred_region
          _
        $region16: #{tpu_custom_call.1} parent=11 // pred_fallthru
          _
        // Predicated region
        $region17: #{tpu_custom_call.1} parent=11 // pred_check
          %p487 = pneg %p73
        $region18: #{tpu_custom_call.1} parent=11 // pred_check_branch
          %489 = sbr.rel (%p487) target = $region20
        $region19: #{tpu_custom_call.1} parent=11 // pred_region
          _
        $region20: #{tpu_custom_call.1} parent=11 // pred_fallthru
          _
        // Predicated region
        $region21: #{tpu_custom_call.1} parent=11 // pred_check
          %p490 = pneg %p406
        $region22: #{tpu_custom_call.1} parent=11 // pred_check_branch
          %492 = sbr.rel (%p490) target = $region24
        $region23: #{tpu_custom_call.1} parent=11 // pred_region
          _
        $region24: #{tpu_custom_call.1} parent=11 // pred_fallthru
          _
        // Predicated region
        $region25: #{tpu_custom_call.1} parent=11 // pred_check
          %p493 = pneg %p427
        $region26: #{tpu_custom_call.1} parent=11 // pred_check_branch
          %495 = sbr.rel (%p493) target = $region28
        $region27: #{tpu_custom_call.1} parent=11 // pred_region
          _
        $region28: #{tpu_custom_call.1} parent=11 // pred_fallthru
          _
        // Predicated region
        $region29: #{tpu_custom_call.1} parent=11 // pred_check
          %p496 = pneg %p448
        $region30: #{tpu_custom_call.1} parent=11 // pred_check_branch
          %498 = sbr.rel (%p496) target = $region32
        $region31: #{tpu_custom_call.1} parent=11 // pred_region
          _
        $region32: #{tpu_custom_call.1} parent=11 // pred_fallthru
          _
      $region12: #{tpu_custom_call.1} parent=5 // pred_fallthru
        _
      %p499 = scmp.lt.s32.totalorder %s31, 2
      // Predicated region
      $region33: #{tpu_custom_call.1} parent=5 // pred_check
        %p500 = pneg %p499
      $region34: #{tpu_custom_call.1} parent=5 // pred_check_branch
        %502 = sbr.rel (%p500) target = $region36
      $region35: #{tpu_custom_call.1} parent=5 // pred_region
        // Predicated region
        $region37: #{tpu_custom_call.1} parent=35 // pred_check
          %p503 = pneg %p93
        $region38: #{tpu_custom_call.1} parent=35 // pred_check_branch
          %505 = sbr.rel (%p503) target = $region40
        $region39: #{tpu_custom_call.1} parent=35 // pred_region
          %p506 = scmp.lt.s32.totalorder %s31, 1
          %s507 = scalar_select %p506, %s31, 1
          %s508 = scalar_lea.vmem %s3, %s507
        $region40: #{tpu_custom_call.1} parent=35 // pred_fallthru
          _
        // Predicated region
        $region41: #{tpu_custom_call.1} parent=35 // pred_check
          %p509 = pneg %p119
        $region42: #{tpu_custom_call.1} parent=35 // pred_check_branch
          %511 = sbr.rel (%p509) target = $region44
        $region43: #{tpu_custom_call.1} parent=35 // pred_region
          %p512 = scmp.lt.s32.totalorder %s31, 1
          %s513 = scalar_select %p512, %s31, 1
          %s514 = scalar_lea.vmem %s4, %s513
        $region44: #{tpu_custom_call.1} parent=35 // pred_fallthru
          _
        // Predicated region
        $region45: #{tpu_custom_call.1} parent=35 // pred_check
          %p515 = pneg %p145
        $region46: #{tpu_custom_call.1} parent=35 // pred_check_branch
          %517 = sbr.rel (%p515) target = $region48
        $region47: #{tpu_custom_call.1} parent=35 // pred_region
          %p518 = scmp.lt.s32.totalorder %s31, 1
          %s519 = scalar_select %p518, %s31, 1
          %s520 = smul.addr %s519, 4
          %s521 = smul.addr %s520, 4
          %s522 = scalar_lea.vmem %s5, %s521
        $region48: #{tpu_custom_call.1} parent=35 // pred_fallthru
          _
        // Predicated region
        $region49: #{tpu_custom_call.1} parent=35 // pred_check
          %p523 = pneg %p171
        $region50: #{tpu_custom_call.1} parent=35 // pred_check_branch
          %525 = sbr.rel (%p523) target = $region52
        $region51: #{tpu_custom_call.1} parent=35 // pred_region
          %p526 = scmp.lt.s32.totalorder %s31, 1
          %s527 = scalar_select %p526, %s31, 1
          %s528 = scalar_lea.vmem %s6, %s527
        $region52: #{tpu_custom_call.1} parent=35 // pred_fallthru
          _
        // Predicated region
        $region53: #{tpu_custom_call.1} parent=35 // pred_check
          %p529 = pneg %p197
        $region54: #{tpu_custom_call.1} parent=35 // pred_check_branch
          %531 = sbr.rel (%p529) target = $region56
        $region55: #{tpu_custom_call.1} parent=35 // pred_region
          %p532 = scmp.lt.s32.totalorder %s31, 1
          %s533 = scalar_select %p532, %s31, 1
          %s534 = smul.addr %s533, 4
          %s535 = smul.addr %s534, 4
          %s536 = scalar_lea.vmem %s7, %s535
        $region56: #{tpu_custom_call.1} parent=35 // pred_fallthru
          _
        // Predicated region
        $region57: #{tpu_custom_call.1} parent=35 // pred_check
          %p537 = pneg %p223
        $region58: #{tpu_custom_call.1} parent=35 // pred_check_branch
          %539 = sbr.rel (%p537) target = $region60
        $region59: #{tpu_custom_call.1} parent=35 // pred_region
          %p540 = scmp.lt.s32.totalorder %s31, 1
          %s541 = scalar_select %p540, %s31, 1
          %s542 = scalar_lea.vmem %s8, %s541
        $region60: #{tpu_custom_call.1} parent=35 // pred_fallthru
          _
        // Predicated region
        $region61: #{tpu_custom_call.1} parent=35 // pred_check
          %p543 = pneg %p249
        $region62: #{tpu_custom_call.1} parent=35 // pred_check_branch
          %545 = sbr.rel (%p543) target = $region64
        $region63: #{tpu_custom_call.1} parent=35 // pred_region
          %p546 = scmp.lt.s32.totalorder %s31, 1
          %s547 = scalar_select %p546, %s31, 1
          %s548 = scalar_lea.vmem %s9, %s547
        $region64: #{tpu_custom_call.1} parent=35 // pred_fallthru
          _
        // Predicated region
        $region65: #{tpu_custom_call.1} parent=35 // pred_check
          %p549 = pneg %p275
        $region66: #{tpu_custom_call.1} parent=35 // pred_check_branch
          %551 = sbr.rel (%p549) target = $region68
        $region67: #{tpu_custom_call.1} parent=35 // pred_region
          %p552 = scmp.lt.s32.totalorder %s31, 1
          %s553 = scalar_select %p552, %s31, 1
          %s554 = scalar_lea.vmem %s10, %s553
        $region68: #{tpu_custom_call.1} parent=35 // pred_fallthru
          _
        // Predicated region
        $region69: #{tpu_custom_call.1} parent=35 // pred_check
          %p555 = pneg %p301
        $region70: #{tpu_custom_call.1} parent=35 // pred_check_branch
          %557 = sbr.rel (%p555) target = $region72
        $region71: #{tpu_custom_call.1} parent=35 // pred_region
          %p558 = scmp.lt.s32.totalorder %s31, 1
          %s559 = scalar_select %p558, %s31, 1
          %s560 = smul.addr %s559, 4
          %s561 = smul.addr %s560, 4
          %s562 = scalar_lea.vmem %s11, %s561
        $region72: #{tpu_custom_call.1} parent=35 // pred_fallthru
          _
        // Predicated region
        $region73: #{tpu_custom_call.1} parent=35 // pred_check
          %p563 = pneg %p327
        $region74: #{tpu_custom_call.1} parent=35 // pred_check_branch
          %565 = sbr.rel (%p563) target = $region76
        $region75: #{tpu_custom_call.1} parent=35 // pred_region
          %p566 = scmp.lt.s32.totalorder %s31, 1
          %s567 = scalar_select %p566, %s31, 1
          %s568 = scalar_lea.vmem %s12, %s567
        $region76: #{tpu_custom_call.1} parent=35 // pred_fallthru
          _
        // Predicated region
        $region77: #{tpu_custom_call.1} parent=35 // pred_check
          %p569 = pneg %p353
        $region78: #{tpu_custom_call.1} parent=35 // pred_check_branch
          %571 = sbr.rel (%p569) target = $region80
        $region79: #{tpu_custom_call.1} parent=35 // pred_region
          %p572 = scmp.lt.s32.totalorder %s31, 1
          %s573 = scalar_select %p572, %s31, 1
          %s574 = smul.addr %s573, 16
          %s575 = smul.addr %s574, 4
          %s576 = scalar_lea.vmem %s13, %s575
        $region80: #{tpu_custom_call.1} parent=35 // pred_fallthru
          _
        // Predicated region
        $region81: #{tpu_custom_call.1} parent=35 // pred_check
          %p577 = pneg %p379
        $region82: #{tpu_custom_call.1} parent=35 // pred_check_branch
          %579 = sbr.rel (%p577) target = $region84
        $region83: #{tpu_custom_call.1} parent=35 // pred_region
          %p580 = scmp.lt.s32.totalorder %s31, 1
          %s581 = scalar_select %p580, %s31, 1
          %s582 = scalar_lea.vmem %s14, %s581
        $region84: #{tpu_custom_call.1} parent=35 // pred_fallthru
          _
      $region36: #{tpu_custom_call.1} parent=5 // pred_fallthru
        _
      %p583 = scmp.le.s32.totalorder 1, %s31
      %p584 = scmp.lt.s32.totalorder %s31, 3
      %p585 = pnand %p583, %p584
      %p586 = pneg %p585
      // Predicated region
      $region85: #{tpu_custom_call.1} parent=5 // pred_check
        _
      $region86: #{tpu_custom_call.1} parent=5 // pred_check_branch
        %588 = sbr.rel (%p585) target = $region88
      $region87: #{tpu_custom_call.1} parent=5 // pred_region
        %s589 = ssub.s32 %s31, 1
        %p590 = pneg %p52
        %p591 = pneg %p49
        %p592 = pneg %p73
        %p593 = pneg %p70
        %p594 = scmp.lt.s32.totalorder %s36, 1
        %s595 = scalar_select %p594, %s36, 1
        %s596 = scalar_lea.vmem %s3, %s595
        %p597 = pneg %p99
        %p598 = pneg %p96
        %p599 = scmp.lt.s32.totalorder %s36, 1
        %s600 = scalar_select %p599, %s36, 1
        %s601 = scalar_lea.vmem %s4, %s600
        %p602 = pneg %p125
        %p603 = pneg %p122
        %p604 = scmp.lt.s32.totalorder %s36, 1
        %s605 = scalar_select %p604, %s36, 1
        %s606 = smul.addr %s605, 4
        %s607 = smul.addr %s606, 4
        %s608 = scalar_lea.vmem %s5, %s607
        %p609 = pneg %p151
        %p610 = pneg %p148
        %p611 = scmp.lt.s32.totalorder %s36, 1
        %s612 = scalar_select %p611, %s36, 1
        %s613 = scalar_lea.vmem %s6, %s612
        %p614 = pneg %p177
        %p615 = pneg %p174
        %p616 = scmp.lt.s32.totalorder %s36, 1
        %s617 = scalar_select %p616, %s36, 1
        %s618 = smul.addr %s617, 4
        %s619 = smul.addr %s618, 4
        %s620 = scalar_lea.vmem %s7, %s619
        %p621 = pneg %p203
        %p622 = pneg %p200
        %p623 = scmp.lt.s32.totalorder %s36, 1
        %s624 = scalar_select %p623, %s36, 1
        %s625 = scalar_lea.vmem %s8, %s624
        %p626 = pneg %p229
        %p627 = pneg %p226
        %p628 = scmp.lt.s32.totalorder %s36, 1
        %s629 = scalar_select %p628, %s36, 1
        %s630 = scalar_lea.vmem %s9, %s629
        %p631 = pneg %p255
        %p632 = pneg %p252
        %p633 = scmp.lt.s32.totalorder %s36, 1
        %s634 = scalar_select %p633, %s36, 1
        %s635 = scalar_lea.vmem %s10, %s634
        %p636 = pneg %p281
        %p637 = pneg %p278
        %p638 = scmp.lt.s32.totalorder %s36, 1
        %s639 = scalar_select %p638, %s36, 1
        %s640 = smul.addr %s639, 4
        %s641 = smul.addr %s640, 4
        %s642 = scalar_lea.vmem %s11, %s641
        %p643 = pneg %p307
        %p644 = pneg %p304
        %p645 = scmp.lt.s32.totalorder %s36, 1
        %s646 = scalar_select %p645, %s36, 1
        %s647 = scalar_lea.vmem %s12, %s646
        %p648 = pneg %p333
        %p649 = pneg %p330
        %p650 = scmp.lt.s32.totalorder %s36, 1
        %s651 = scalar_select %p650, %s36, 1
        %s652 = smul.addr %s651, 16
        %s653 = smul.addr %s652, 4
        %s654 = scalar_lea.vmem %s13, %s653
        %p655 = pneg %p359
        %p656 = pneg %p356
        %p657 = scmp.lt.s32.totalorder %s36, 1
        %s658 = scalar_select %p657, %s36, 1
        %s659 = scalar_lea.vmem %s14, %s658
        %p660 = pneg %p385
        %p661 = pneg %p382
        %p662 = pneg %p406
        %p663 = pneg %p403
        %p664 = pneg %p427
        %p665 = pneg %p424
        %p666 = pneg %p448
        %p667 = pneg %p445
        %p668 = pneg %p469
        %p669 = pneg %p466
        %p670 = scmp.lt.s32.totalorder %s36, 1
        %s671 = scalar_select %p670, %s36, 1
        %s672 = scalar_lea.vmem %s3, %s671
        %p673 = scmp.lt.s32.totalorder %s36, 1
        %s674 = scalar_select %p673, %s36, 1
        %s675 = scalar_lea.vmem %s4, %s674
        %p676 = scmp.lt.s32.totalorder %s36, 1
        %s677 = scalar_select %p676, %s36, 1
        %s678 = smul.addr %s677, 4
        %s679 = smul.addr %s678, 4
        %s680 = scalar_lea.vmem %s5, %s679
        %p681 = scmp.lt.s32.totalorder %s36, 1
        %s682 = scalar_select %p681, %s36, 1
        %s683 = scalar_lea.vmem %s6, %s682
        %p684 = scmp.lt.s32.totalorder %s36, 1
        %s685 = scalar_select %p684, %s36, 1
        %s686 = smul.addr %s685, 4
        %s687 = smul.addr %s686, 4
        %s688 = scalar_lea.vmem %s7, %s687
        %p689 = scmp.lt.s32.totalorder %s36, 1
        %s690 = scalar_select %p689, %s36, 1
        %s691 = scalar_lea.vmem %s8, %s690
        %p692 = scmp.lt.s32.totalorder %s36, 1
        %s693 = scalar_select %p692, %s36, 1
        %s694 = scalar_lea.vmem %s9, %s693
        %p695 = scmp.lt.s32.totalorder %s36, 1
        %s696 = scalar_select %p695, %s36, 1
        %s697 = scalar_lea.vmem %s10, %s696
        %p698 = scmp.lt.s32.totalorder %s36, 1
        %s699 = scalar_select %p698, %s36, 1
        %s700 = smul.addr %s699, 4
        %s701 = smul.addr %s700, 4
        %s702 = scalar_lea.vmem %s11, %s701
        %p703 = scmp.lt.s32.totalorder %s36, 1
        %s704 = scalar_select %p703, %s36, 1
        %s705 = scalar_lea.vmem %s12, %s704
        %p706 = scmp.lt.s32.totalorder %s36, 1
        %s707 = scalar_select %p706, %s36, 1
        %s708 = smul.addr %s707, 16
        %s709 = smul.addr %s708, 4
        %s710 = scalar_lea.vmem %s13, %s709
        %p711 = scmp.lt.s32.totalorder %s36, 1
        %s712 = scalar_select %p711, %s36, 1
        %s713 = scalar_lea.vmem %s14, %s712
        %p715 = scmp.eq.s32.totalorder %s36, 0
        // Predicated region
        $region89: #{tpu_custom_call.1} parent=87 // pred_check
          %p716 = pneg %p715
        $region90: #{tpu_custom_call.1} parent=87 // pred_check_branch
          %718 = sbr.rel (%p716) target = $region92
        $region91: #{tpu_custom_call.1} parent=87 // pred_region
          %v719 = vld [vmem:[%s1] sm:$0xff]
          %v720 = vld [vmem:[%s1 + $0x8] sm:$0xff]
          %vm721 = vcmask 261120
          %722 = vst.msk [vmem:[#allocation2] sm:$0xff] %vm721, %v719
          %723 = vst.msk [vmem:[#allocation2 + $0x8] sm:$0xff] %vm721, %v720
        $region92: #{tpu_custom_call.1} parent=87 // pred_fallthru
          _
        %v724 = vld [vmem:[#allocation2] sm:$0xff]
        %v725 = vld [vmem:[#allocation2 + $0x8] sm:$0xff]
        %v726 = vld [vmem:[%s672] sm:$0x1]
        %v727 = vld [vmem:[%s675] sm:$0x1]
        %vm728 = vcmask 261120
        %v729 = vsel %vm728, %v724, 0.0
        %730 = vadd.xlane.f32.xlu0 %v729
        %v731 = vpop.xlane.xlu0 %730
        %v732 = vsel %vm728, %v725, 0.0
        %733 = vadd.xlane.f32.xlu0 %v732
        %v734 = vpop.xlane.xlu0 %733
        %v735 = vrcp.pop 32.0
        %v736 = vmul.f32 %v731, %v735
        %v737 = vmul.f32 %v734, %v735
        %v738 = vsub.f32 %v724, %v736
        %v739 = vsub.f32 %v725, %v737
        %v740 = vmul.f32 %v738, %v738
        %v741 = vmul.f32 %v739, %v739
        %v742 = vsel %vm728, %v740, 0.0
        %743 = vadd.xlane.f32.xlu0 %v742
        %v744 = vpop.xlane.xlu0 %743
        %v745 = vsel %vm728, %v741, 0.0
        %746 = vadd.xlane.f32.xlu0 %v745
        %v747 = vpop.xlane.xlu0 %746
        %v748 = vmul.f32 %v744, %v735
        %v749 = vmul.f32 %v747, %v735
        %v750 = vadd.f32 %v748, 1e-05
        %v751 = vadd.f32 %v749, 1e-05
        %v752 = vrsqrt.pop %v750
        %v753 = vrsqrt.pop %v751
        %v754 = vmul.f32 %v738, %v752
        %v755 = vmul.f32 %v739, %v753
        %v757 = vlaneseq
        %v758 = vshrl.u32 %v757, 7
        %v759 = vsub.s32 0, %v758
        %v760 = vrot.slane %v726, %v759
        %v762 = vmul.f32 %v754, %v760
        %v763 = vmul.f32 %v755, %v760
        %v765 = vlaneseq
        %v766 = vshrl.u32 %v765, 7
        %v767 = vsub.s32 0, %v766
        %v768 = vrot.slane %v727, %v767
        %v770 = vadd.f32 %v762, %v768
        %v771 = vadd.f32 %v763, %v768
        %v772 = vpack.c.bf16 %v771, %v770
        %v773 = vld [vmem:[%s680] sm:$0xf]
        %v774 = vld [vmem:[%s680 + $0x4] sm:$0xf]
        %v775 = vld [vmem:[%s680 + $0x8] sm:$0xf]
        %v776 = vld [vmem:[%s680 + $0xc] sm:$0xf]
        %v777 = vld [vmem:[%s683] sm:$0x1]
        %v779 = vlaneseq
        %v780 = vshrl.u32 %v779, 7
        %v781 = vsub.s32 0, %v780
        %v782 = vrot.slane %v777, %v781
        %v788 = vunpack.c.l.b16 %v773
        %v789 = vunpack.c.l.b16 %v774
        %v790 = vunpack.c.l.b16 %v775
        %v791 = vunpack.c.l.b16 %v776
        %v792 = vpack.c.b16 %v789, %v788
        %v793 = vpack.c.b16 %v791, %v790
        %v797 = vsel %vm728, %v772, 0
        %799 = vmatprep.subr.bf16.mxu0 0
        %800 = vmatpush1.bf16.msra.mxu0 %v792
        %801 = vmatprep.subr.bf16.mxu0 0
        %802 = vmatpush1.bf16.msra.mxu0 %v793
        %803 = vmatprep.subr.bf16.mxu0 0
        %804 = vmatpush1.bf16.msra.mxu0 0
        %805 = vmatprep.subr.bf16.mxu0 0
        %806 = vmatpush1.bf16.msra.mxu0 0
        %807 = vmatprep.subr.bf16.mxu0 0
        %808 = vmatpush1.bf16.msra.mxu0 0
        %809 = vmatprep.subr.bf16.mxu0 0
        %810 = vmatpush1.bf16.msra.mxu0 0
        %811 = vmatprep.subr.bf16.mxu0 0
        %812 = vmatpush1.bf16.msra.mxu0 0
        %813 = vmatprep.subr.bf16.mxu0 0
        %814 = vmatpush1.bf16.msra.mxu0 0
        %815 = vmatprep.subr.bf16.mxu0 0
        %816 = vmatpush1.bf16.msra.mxu0 0
        %817 = vmatprep.subr.bf16.mxu0 0
        %818 = vmatpush1.bf16.msra.mxu0 0
        %819 = vmatprep.subr.bf16.mxu0 0
        %820 = vmatpush1.bf16.msra.mxu0 0
        %821 = vmatprep.subr.bf16.mxu0 0
        %822 = vmatpush1.bf16.msra.mxu0 0
        %823 = vmatprep.subr.bf16.mxu0 0
        %824 = vmatpush1.bf16.msra.mxu0 0
        %825 = vmatprep.subr.bf16.mxu0 0
        %826 = vmatpush1.bf16.msra.mxu0 0
        %827 = vmatprep.subr.bf16.mxu0 0
        %828 = vmatpush1.bf16.msra.mxu0 0
        %829 = vmatprep.subr.bf16.mxu0 0
        %830 = vmatpush1.bf16.msra.mxu0 0
        %831 = vmatprep.mubr.bf16.mxu0 0
        %832 = vmatmul.mubr.bf16.gmra.mrb[0].mxu0 %v797
        %v833 = vpop.f32.mrb[0].mxu0
        %v834 = vadd.f32 %v782, %v833
        %v835 = vpop.f32.mrb[0].mxu0
        %v836 = vpop.f32.mrb[0].mxu0
        %v837 = vadd.f32 %v782, %v836
        %v838 = vpop.f32.mrb[0].mxu0
        %839 = vdwg.mxu0
        %v840 = vld [vmem:[%s2] sm:$0xff]
        %v841 = vpack.c.bf16 %v834, %v834
        %v842 = vpack.c.bf16 %v837, %v837
        %844 = vrot.lane.b32.xlu0 %v841, 96
        %v845 = vpop.permute.xlu0 %844
        %vm846 = vcmask 64512
        %v848 = vsel %vm846, %v841, 0
        %v851 = vsel %vm846, %v845, 0
        %853 = vmatprep.subr.bf16.mxu0 0
        %854 = vmatpush1.bf16.xpose.msra.mxu0 %v851
        %855 = vmatprep.subr.bf16.mxu0 0
        %856 = vmatpush1.bf16.xpose.msra.mxu0 0
        %857 = vmatprep.subr.bf16.mxu0 0
        %858 = vmatpush1.bf16.xpose.msra.mxu0 0
        %859 = vmatprep.subr.bf16.mxu0 0
        %860 = vmatpush1.bf16.xpose.msra.mxu0 0
        %861 = vmatprep.subr.bf16.mxu0 0
        %862 = vmatpush1.bf16.xpose.msra.mxu0 0
        %863 = vmatprep.subr.bf16.mxu0 0
        %864 = vmatpush1.bf16.xpose.msra.mxu0 0
        %865 = vmatprep.subr.bf16.mxu0 0
        %866 = vmatpush1.bf16.xpose.msra.mxu0 0
        %867 = vmatprep.subr.bf16.mxu0 0
        %868 = vmatpush1.bf16.xpose.msra.mxu0 0
        %869 = vmatprep.subr.bf16.mxu0 0
        %870 = vmatpush1.bf16.xpose.msra.mxu0 0
        %871 = vmatprep.subr.bf16.mxu0 0
        %872 = vmatpush1.bf16.xpose.msra.mxu0 0
        %873 = vmatprep.subr.bf16.mxu0 0
        %874 = vmatpush1.bf16.xpose.msra.mxu0 0
        %875 = vmatprep.subr.bf16.mxu0 0
        %876 = vmatpush1.bf16.xpose.msra.mxu0 0
        %877 = vmatprep.subr.bf16.mxu0 0
        %878 = vmatpush1.bf16.xpose.msra.mxu0 0
        %879 = vmatprep.subr.bf16.mxu0 0
        %880 = vmatpush1.bf16.xpose.msra.mxu0 0
        %881 = vmatprep.subr.bf16.mxu0 0
        %882 = vmatpush1.bf16.xpose.msra.mxu0 0
        %883 = vmatprep.subr.bf16.mxu0 0
        %884 = vmatpush1.bf16.xpose.msra.mxu0 0
        %885 = vmatprep.mubr.bf16.mxu0 0
        %886 = vmatmul.mubr.bf16.gmra.mrb[0].mxu0 %v848
        %v887 = vpop.f32.mrb[0].mxu0
        %v888 = vadd.f32 %v840, %v887
        %v889 = vpop.f32.mrb[0].mxu0
        %v890 = vpop.f32.mrb[0].mxu0
        %v891 = vpop.f32.mrb[0].mxu0
        %892 = vdwg.mxu0
        %894 = vrot.lane.b32.xlu0 %v842, 96
        %v895 = vpop.permute.xlu0 %894
        %v897 = vsel %vm846, %v842, 0
        %v900 = vsel %vm846, %v895, 0
        %902 = vmatprep.subr.bf16.mxu0 0
        %903 = vmatpush1.bf16.xpose.msra.mxu0 %v900
        %904 = vmatprep.subr.bf16.mxu0 0
        %905 = vmatpush1.bf16.xpose.msra.mxu0 0
        %906 = vmatprep.subr.bf16.mxu0 0
        %907 = vmatpush1.bf16.xpose.msra.mxu0 0
        %908 = vmatprep.subr.bf16.mxu0 0
        %909 = vmatpush1.bf16.xpose.msra.mxu0 0
        %910 = vmatprep.subr.bf16.mxu0 0
        %911 = vmatpush1.bf16.xpose.msra.mxu0 0
        %912 = vmatprep.subr.bf16.mxu0 0
        %913 = vmatpush1.bf16.xpose.msra.mxu0 0
        %914 = vmatprep.subr.bf16.mxu0 0
        %915 = vmatpush1.bf16.xpose.msra.mxu0 0
        %916 = vmatprep.subr.bf16.mxu0 0
        %917 = vmatpush1.bf16.xpose.msra.mxu0 0
        %918 = vmatprep.subr.bf16.mxu0 0
        %919 = vmatpush1.bf16.xpose.msra.mxu0 0
        %920 = vmatprep.subr.bf16.mxu0 0
        %921 = vmatpush1.bf16.xpose.msra.mxu0 0
        %922 = vmatprep.subr.bf16.mxu0 0
        %923 = vmatpush1.bf16.xpose.msra.mxu0 0
        %924 = vmatprep.subr.bf16.mxu0 0
        %925 = vmatpush1.bf16.xpose.msra.mxu0 0
        %926 = vmatprep.subr.bf16.mxu0 0
        %927 = vmatpush1.bf16.xpose.msra.mxu0 0
        %928 = vmatprep.subr.bf16.mxu0 0
        %929 = vmatpush1.bf16.xpose.msra.mxu0 0
        %930 = vmatprep.subr.bf16.mxu0 0
        %931 = vmatpush1.bf16.xpose.msra.mxu0 0
        %932 = vmatprep.subr.bf16.mxu0 0
        %933 = vmatpush1.bf16.xpose.msra.mxu0 0
        %934 = vmatprep.mubr.bf16.mxu0 0
        %935 = vmatmul.mubr.bf16.gmra.mrb[0].mxu0 %v897
        %v936 = vpop.f32.mrb[0].mxu0
        %v937 = vadd.f32 %v840, %v936
        %v938 = vpop.f32.mrb[0].mxu0
        %v939 = vpop.f32.mrb[0].mxu0
        %v940 = vpop.f32.mrb[0].mxu0
        %941 = vdwg.mxu0
        %v942 = vsel %vm846, %v888, -inf
        %943 = vmax.xlane.f32.xlu0 %v942
        %v944 = vpop.xlane.xlu0 %943
        %v945 = vsel %vm846, %v937, -inf
        %946 = vmax.xlane.f32.xlu0 %v945
        %v947 = vpop.xlane.xlu0 %946
        %v948 = vsub.f32 %v888, %v944
        %v949 = vsub.f32 %v937, %v947
        %v950 = vmul.f32 %v948, 1.442695
        %v951 = vpow.pop %v950
        %v952 = vmul.f32 %v949, 1.442695
        %v953 = vpow.pop %v952
        %v954 = vsel %vm846, %v951, 0.0
        %955 = vadd.xlane.f32.xlu0 %v954
        %v956 = vpop.xlane.xlu0 %955
        %v957 = vsel %vm846, %v953, 0.0
        %958 = vadd.xlane.f32.xlu0 %v957
        %v959 = vpop.xlane.xlu0 %958
        %v960 = vrcp.pop %v956
        %v961 = vrcp.pop %v959
        %v962 = vmul.f32 %v951, %v960
        %v963 = vmul.f32 %v953, %v961
        %v964 = vpack.c.bf16 %v962, %v962
        %v965 = vpack.c.bf16 %v963, %v963
        %966 = vrot.lane.b32.xlu0 %v841, 64
        %v967 = vpop.permute.xlu0 %966
        %v969 = vsel %vm846, %v964, 0
        %vm971 = vcmask 1043456
        %v973 = vsel %vm971, %v967, 0
        %975 = vmatprep.subr.bf16.mxu0 0
        %976 = vmatpush1.bf16.msra.mxu0 %v973
        %977 = vmatprep.subr.bf16.mxu0 0
        %978 = vmatpush1.bf16.msra.mxu0 0
        %979 = vmatprep.subr.bf16.mxu0 0
        %980 = vmatpush1.bf16.msra.mxu0 0
        %981 = vmatprep.subr.bf16.mxu0 0
        %982 = vmatpush1.bf16.msra.mxu0 0
        %983 = vmatprep.subr.bf16.mxu0 0
        %984 = vmatpush1.bf16.msra.mxu0 0
        %985 = vmatprep.subr.bf16.mxu0 0
        %986 = vmatpush1.bf16.msra.mxu0 0
        %987 = vmatprep.subr.bf16.mxu0 0
        %988 = vmatpush1.bf16.msra.mxu0 0
        %989 = vmatprep.subr.bf16.mxu0 0
        %990 = vmatpush1.bf16.msra.mxu0 0
        %991 = vmatprep.subr.bf16.mxu0 0
        %992 = vmatpush1.bf16.msra.mxu0 0
        %993 = vmatprep.subr.bf16.mxu0 0
        %994 = vmatpush1.bf16.msra.mxu0 0
        %995 = vmatprep.subr.bf16.mxu0 0
        %996 = vmatpush1.bf16.msra.mxu0 0
        %997 = vmatprep.subr.bf16.mxu0 0
        %998 = vmatpush1.bf16.msra.mxu0 0
        %999 = vmatprep.subr.bf16.mxu0 0
        %1000 = vmatpush1.bf16.msra.mxu0 0
        %1001 = vmatprep.subr.bf16.mxu0 0
        %1002 = vmatpush1.bf16.msra.mxu0 0
        %1003 = vmatprep.subr.bf16.mxu0 0
        %1004 = vmatpush1.bf16.msra.mxu0 0
        %1005 = vmatprep.subr.bf16.mxu0 0
        %1006 = vmatpush1.bf16.msra.mxu0 0
        %1007 = vmatprep.mubr.bf16.mxu0 0
        %1008 = vmatmul.mubr.bf16.gmra.mrb[0].mxu0 %v969
        %v1009 = vpop.f32.mrb[0].mxu0
        %v1010 = vadd.f32 0.0, %v1009
        %v1011 = vpop.f32.mrb[0].mxu0
        %v1012 = vpop.f32.mrb[0].mxu0
        %v1013 = vpop.f32.mrb[0].mxu0
        %1014 = vdwg.mxu0
        %1015 = vrot.lane.b32.xlu0 %v842, 64
        %v1016 = vpop.permute.xlu0 %1015
        %v1018 = vsel %vm846, %v965, 0
        %v1021 = vsel %vm971, %v1016, 0
        %1023 = vmatprep.subr.bf16.mxu0 0
        %1024 = vmatpush1.bf16.msra.mxu0 %v1021
        %1025 = vmatprep.subr.bf16.mxu0 0
        %1026 = vmatpush1.bf16.msra.mxu0 0
        %1027 = vmatprep.subr.bf16.mxu0 0
        %1028 = vmatpush1.bf16.msra.mxu0 0
        %1029 = vmatprep.subr.bf16.mxu0 0
        %1030 = vmatpush1.bf16.msra.mxu0 0
        %1031 = vmatprep.subr.bf16.mxu0 0
        %1032 = vmatpush1.bf16.msra.mxu0 0
        %1033 = vmatprep.subr.bf16.mxu0 0
        %1034 = vmatpush1.bf16.msra.mxu0 0
        %1035 = vmatprep.subr.bf16.mxu0 0
        %1036 = vmatpush1.bf16.msra.mxu0 0
        %1037 = vmatprep.subr.bf16.mxu0 0
        %1038 = vmatpush1.bf16.msra.mxu0 0
        %1039 = vmatprep.subr.bf16.mxu0 0
        %1040 = vmatpush1.bf16.msra.mxu0 0
        %1041 = vmatprep.subr.bf16.mxu0 0
        %1042 = vmatpush1.bf16.msra.mxu0 0
        %1043 = vmatprep.subr.bf16.mxu0 0
        %1044 = vmatpush1.bf16.msra.mxu0 0
        %1045 = vmatprep.subr.bf16.mxu0 0
        %1046 = vmatpush1.bf16.msra.mxu0 0
        %1047 = vmatprep.subr.bf16.mxu0 0
        %1048 = vmatpush1.bf16.msra.mxu0 0
        %1049 = vmatprep.subr.bf16.mxu0 0
        %1050 = vmatpush1.bf16.msra.mxu0 0
        %1051 = vmatprep.subr.bf16.mxu0 0
        %1052 = vmatpush1.bf16.msra.mxu0 0
        %1053 = vmatprep.subr.bf16.mxu0 0
        %1054 = vmatpush1.bf16.msra.mxu0 0
        %1055 = vmatprep.mubr.bf16.mxu0 0
        %1056 = vmatmul.mubr.bf16.gmra.mrb[0].mxu0 %v1018
        %v1057 = vpop.f32.mrb[0].mxu0
        %v1058 = vadd.f32 0.0, %v1057
        %v1059 = vpop.f32.mrb[0].mxu0
        %v1060 = vpop.f32.mrb[0].mxu0
        %v1061 = vpop.f32.mrb[0].mxu0
        %1062 = vdwg.mxu0
        %1063 = vrot.lane.b32.xlu0 %v841, 120
        %v1064 = vpop.permute.xlu0 %1063
        %1065 = vrot.lane.b32.xlu0 %v841, 88
        %v1066 = vpop.permute.xlu0 %1065
        %v1068 = vsel %vm846, %v1064, 0
        %v1071 = vsel %vm846, %v1066, 0
        %1073 = vmatprep.subr.bf16.mxu0 0
        %1074 = vmatpush1.bf16.xpose.msra.mxu0 %v1071
        %1075 = vmatprep.subr.bf16.mxu0 0
        %1076 = vmatpush1.bf16.xpose.msra.mxu0 0
        %1077 = vmatprep.subr.bf16.mxu0 0
        %1078 = vmatpush1.bf16.xpose.msra.mxu0 0
        %1079 = vmatprep.subr.bf16.mxu0 0
        %1080 = vmatpush1.bf16.xpose.msra.mxu0 0
        %1081 = vmatprep.subr.bf16.mxu0 0
        %1082 = vmatpush1.bf16.xpose.msra.mxu0 0
        %1083 = vmatprep.subr.bf16.mxu0 0
        %1084 = vmatpush1.bf16.xpose.msra.mxu0 0
        %1085 = vmatprep.subr.bf16.mxu0 0
        %1086 = vmatpush1.bf16.xpose.msra.mxu0 0
        %1087 = vmatprep.subr.bf16.mxu0 0
        %1088 = vmatpush1.bf16.xpose.msra.mxu0 0
        %1089 = vmatprep.subr.bf16.mxu0 0
        %1090 = vmatpush1.bf16.xpose.msra.mxu0 0
        %1091 = vmatprep.subr.bf16.mxu0 0
        %1092 = vmatpush1.bf16.xpose.msra.mxu0 0
        %1093 = vmatprep.subr.bf16.mxu0 0
        %1094 = vmatpush1.bf16.xpose.msra.mxu0 0
        %1095 = vmatprep.subr.bf16.mxu0 0
        %1096 = vmatpush1.bf16.xpose.msra.mxu0 0
        %1097 = vmatprep.subr.bf16.mxu0 0
        %1098 = vmatpush1.bf16.xpose.msra.mxu0 0
        %1099 = vmatprep.subr.bf16.mxu0 0
        %1100 = vmatpush1.bf16.xpose.msra.mxu0 0
        %1101 = vmatprep.subr.bf16.mxu0 0
        %1102 = vmatpush1.bf16.xpose.msra.mxu0 0
        %1103 = vmatprep.subr.bf16.mxu0 0
        %1104 = vmatpush1.bf16.xpose.msra.mxu0 0
        %1105 = vmatprep.mubr.bf16.mxu0 0
        %1106 = vmatmul.mubr.bf16.gmra.mrb[0].mxu0 %v1068
        %v1107 = vpop.f32.mrb[0].mxu0
        %v1108 = vadd.f32 %v840, %v1107
        %v1109 = vpop.f32.mrb[0].mxu0
        %v1110 = vpop.f32.mrb[0].mxu0
        %v1111 = vpop.f32.mrb[0].mxu0
        %1112 = vdwg.mxu0
        %1113 = vrot.lane.b32.xlu0 %v842, 120
        %v1114 = vpop.permute.xlu0 %1113
        %1115 = vrot.lane.b32.xlu0 %v842, 88
        %v1116 = vpop.permute.xlu0 %1115
        %v1118 = vsel %vm846, %v1114, 0
        %v1121 = vsel %vm846, %v1116, 0
        %1123 = vmatprep.subr.bf16.mxu0 0
        %1124 = vmatpush1.bf16.xpose.msra.mxu0 %v1121
        %1125 = vmatprep.subr.bf16.mxu0 0
        %1126 = vmatpush1.bf16.xpose.msra.mxu0 0
        %1127 = vmatprep.subr.bf16.mxu0 0
        %1128 = vmatpush1.bf16.xpose.msra.mxu0 0
        %1129 = vmatprep.subr.bf16.mxu0 0
        %1130 = vmatpush1.bf16.xpose.msra.mxu0 0
        %1131 = vmatprep.subr.bf16.mxu0 0
        %1132 = vmatpush1.bf16.xpose.msra.mxu0 0
        %1133 = vmatprep.subr.bf16.mxu0 0
        %1134 = vmatpush1.bf16.xpose.msra.mxu0 0
        %1135 = vmatprep.subr.bf16.mxu0 0
        %1136 = vmatpush1.bf16.xpose.msra.mxu0 0
        %1137 = vmatprep.subr.bf16.mxu0 0
        %1138 = vmatpush1.bf16.xpose.msra.mxu0 0
        %1139 = vmatprep.subr.bf16.mxu0 0
        %1140 = vmatpush1.bf16.xpose.msra.mxu0 0
        %1141 = vmatprep.subr.bf16.mxu0 0
        %1142 = vmatpush1.bf16.xpose.msra.mxu0 0
        %1143 = vmatprep.subr.bf16.mxu0 0
        %1144 = vmatpush1.bf16.xpose.msra.mxu0 0
        %1145 = vmatprep.subr.bf16.mxu0 0
        %1146 = vmatpush1.bf16.xpose.msra.mxu0 0
        %1147 = vmatprep.subr.bf16.mxu0 0
        %1148 = vmatpush1.bf16.xpose.msra.mxu0 0
        %1149 = vmatprep.subr.bf16.mxu0 0
        %1150 = vmatpush1.bf16.xpose.msra.mxu0 0
        %1151 = vmatprep.subr.bf16.mxu0 0
        %1152 = vmatpush1.bf16.xpose.msra.mxu0 0
        %1153 = vmatprep.subr.bf16.mxu0 0
        %1154 = vmatpush1.bf16.xpose.msra.mxu0 0
        %1155 = vmatprep.mubr.bf16.mxu0 0
        %1156 = vmatmul.mubr.bf16.gmra.mrb[0].mxu0 %v1118
        %v1157 = vpop.f32.mrb[0].mxu0
        %v1158 = vadd.f32 %v840, %v1157
        %v1159 = vpop.f32.mrb[0].mxu0
        %v1160 = vpop.f32.mrb[0].mxu0
        %v1161 = vpop.f32.mrb[0].mxu0
        %1162 = vdwg.mxu0
        %v1163 = vsel %vm846, %v1108, -inf
        %1164 = vmax.xlane.f32.xlu0 %v1163
        %v1165 = vpop.xlane.xlu0 %1164
        %v1166 = vsel %vm846, %v1158, -inf
        %1167 = vmax.xlane.f32.xlu0 %v1166
        %v1168 = vpop.xlane.xlu0 %1167
        %v1169 = vsub.f32 %v1108, %v1165
        %v1170 = vsub.f32 %v1158, %v1168
        %v1171 = vmul.f32 %v1169, 1.442695
        %v1172 = vpow.pop %v1171
        %v1173 = vmul.f32 %v1170, 1.442695
        %v1174 = vpow.pop %v1173
        %v1175 = vsel %vm846, %v1172, 0.0
        %1176 = vadd.xlane.f32.xlu0 %v1175
        %v1177 = vpop.xlane.xlu0 %1176
        %v1178 = vsel %vm846, %v1174, 0.0
        %1179 = vadd.xlane.f32.xlu0 %v1178
        %v1180 = vpop.xlane.xlu0 %1179
        %v1181 = vrcp.pop %v1177
        %v1182 = vrcp.pop %v1180
        %v1183 = vmul.f32 %v1172, %v1181
        %v1184 = vmul.f32 %v1174, %v1182
        %v1185 = vpack.c.bf16 %v1183, %v1183
        %v1186 = vpack.c.bf16 %v1184, %v1184
        %1187 = vrot.lane.b32.xlu0 %v841, 56
        %v1188 = vpop.permute.xlu0 %1187
        %v1190 = vsel %vm846, %v1185, 0
        %v1193 = vsel %vm971, %v1188, 0
        %1195 = vmatprep.subr.bf16.mxu0 0
        %1196 = vmatpush1.bf16.msra.mxu0 %v1193
        %1197 = vmatprep.subr.bf16.mxu0 0
        %1198 = vmatpush1.bf16.msra.mxu0 0
        %1199 = vmatprep.subr.bf16.mxu0 0
        %1200 = vmatpush1.bf16.msra.mxu0 0
        %1201 = vmatprep.subr.bf16.mxu0 0
        %1202 = vmatpush1.bf16.msra.mxu0 0
        %1203 = vmatprep.subr.bf16.mxu0 0
        %1204 = vmatpush1.bf16.msra.mxu0 0
        %1205 = vmatprep.subr.bf16.mxu0 0
        %1206 = vmatpush1.bf16.msra.mxu0 0
        %1207 = vmatprep.subr.bf16.mxu0 0
        %1208 = vmatpush1.bf16.msra.mxu0 0
        %1209 = vmatprep.subr.bf16.mxu0 0
        %1210 = vmatpush1.bf16.msra.mxu0 0
        %1211 = vmatprep.subr.bf16.mxu0 0
        %1212 = vmatpush1.bf16.msra.mxu0 0
        %1213 = vmatprep.subr.bf16.mxu0 0
        %1214 = vmatpush1.bf16.msra.mxu0 0
        %1215 = vmatprep.subr.bf16.mxu0 0
        %1216 = vmatpush1.bf16.msra.mxu0 0
        %1217 = vmatprep.subr.bf16.mxu0 0
        %1218 = vmatpush1.bf16.msra.mxu0 0
        %1219 = vmatprep.subr.bf16.mxu0 0
        %1220 = vmatpush1.bf16.msra.mxu0 0
        %1221 = vmatprep.subr.bf16.mxu0 0
        %1222 = vmatpush1.bf16.msra.mxu0 0
        %1223 = vmatprep.subr.bf16.mxu0 0
        %1224 = vmatpush1.bf16.msra.mxu0 0
        %1225 = vmatprep.subr.bf16.mxu0 0
        %1226 = vmatpush1.bf16.msra.mxu0 0
        %1227 = vmatprep.mubr.bf16.mxu0 0
        %1228 = vmatmul.mubr.bf16.gmra.mrb[0].mxu0 %v1190
        %v1229 = vpop.f32.mrb[0].mxu0
        %v1230 = vadd.f32 0.0, %v1229
        %v1231 = vpop.f32.mrb[0].mxu0
        %v1232 = vpop.f32.mrb[0].mxu0
        %v1233 = vpop.f32.mrb[0].mxu0
        %1234 = vdwg.mxu0
        %1235 = vrot.lane.b32.xlu0 %v842, 56
        %v1236 = vpop.permute.xlu0 %1235
        %v1238 = vsel %vm846, %v1186, 0
        %v1241 = vsel %vm971, %v1236, 0
        %1243 = vmatprep.subr.bf16.mxu0 0
        %1244 = vmatpush1.bf16.msra.mxu0 %v1241
        %1245 = vmatprep.subr.bf16.mxu0 0
        %1246 = vmatpush1.bf16.msra.mxu0 0
        %1247 = vmatprep.subr.bf16.mxu0 0
        %1248 = vmatpush1.bf16.msra.mxu0 0
        %1249 = vmatprep.subr.bf16.mxu0 0
        %1250 = vmatpush1.bf16.msra.mxu0 0
        %1251 = vmatprep.subr.bf16.mxu0 0
        %1252 = vmatpush1.bf16.msra.mxu0 0
        %1253 = vmatprep.subr.bf16.mxu0 0
        %1254 = vmatpush1.bf16.msra.mxu0 0
        %1255 = vmatprep.subr.bf16.mxu0 0
        %1256 = vmatpush1.bf16.msra.mxu0 0
        %1257 = vmatprep.subr.bf16.mxu0 0
        %1258 = vmatpush1.bf16.msra.mxu0 0
        %1259 = vmatprep.subr.bf16.mxu0 0
        %1260 = vmatpush1.bf16.msra.mxu0 0
        %1261 = vmatprep.subr.bf16.mxu0 0
        %1262 = vmatpush1.bf16.msra.mxu0 0
        %1263 = vmatprep.subr.bf16.mxu0 0
        %1264 = vmatpush1.bf16.msra.mxu0 0
        %1265 = vmatprep.subr.bf16.mxu0 0
        %1266 = vmatpush1.bf16.msra.mxu0 0
        %1267 = vmatprep.subr.bf16.mxu0 0
        %1268 = vmatpush1.bf16.msra.mxu0 0
        %1269 = vmatprep.subr.bf16.mxu0 0
        %1270 = vmatpush1.bf16.msra.mxu0 0
        %1271 = vmatprep.subr.bf16.mxu0 0
        %1272 = vmatpush1.bf16.msra.mxu0 0
        %1273 = vmatprep.subr.bf16.mxu0 0
        %1274 = vmatpush1.bf16.msra.mxu0 0
        %1275 = vmatprep.mubr.bf16.mxu0 0
        %1276 = vmatmul.mubr.bf16.gmra.mrb[0].mxu0 %v1238
        %v1277 = vpop.f32.mrb[0].mxu0
        %v1278 = vadd.f32 0.0, %v1277
        %v1279 = vpop.f32.mrb[0].mxu0
        %v1280 = vpop.f32.mrb[0].mxu0
        %v1281 = vpop.f32.mrb[0].mxu0
        %1282 = vdwg.mxu0
        %1283 = vrot.lane.b32.xlu0 %v841, 112
        %v1284 = vpop.permute.xlu0 %1283
        %1285 = vrot.lane.b32.xlu0 %v841, 80
        %v1286 = vpop.permute.xlu0 %1285
        %v1288 = vsel %vm846, %v1284, 0
        %v1291 = vsel %vm846, %v1286, 0
        %1293 = vmatprep.subr.bf16.mxu0 0
        %1294 = vmatpush1.bf16.xpose.msra.mxu0 %v1291
        %1295 = vmatprep.subr.bf16.mxu0 0
        %1296 = vmatpush1.bf16.xpose.msra.mxu0 0
        %1297 = vmatprep.subr.bf16.mxu0 0
        %1298 = vmatpush1.bf16.xpose.msra.mxu0 0
        %1299 = vmatprep.subr.bf16.mxu0 0
        %1300 = vmatpush1.bf16.xpose.msra.mxu0 0
        %1301 = vmatprep.subr.bf16.mxu0 0
        %1302 = vmatpush1.bf16.xpose.msra.mxu0 0
        %1303 = vmatprep.subr.bf16.mxu0 0
        %1304 = vmatpush1.bf16.xpose.msra.mxu0 0
        %1305 = vmatprep.subr.bf16.mxu0 0
        %1306 = vmatpush1.bf16.xpose.msra.mxu0 0
        %1307 = vmatprep.subr.bf16.mxu0 0
        %1308 = vmatpush1.bf16.xpose.msra.mxu0 0
        %1309 = vmatprep.subr.bf16.mxu0 0
        %1310 = vmatpush1.bf16.xpose.msra.mxu0 0
        %1311 = vmatprep.subr.bf16.mxu0 0
        %1312 = vmatpush1.bf16.xpose.msra.mxu0 0
        %1313 = vmatprep.subr.bf16.mxu0 0
        %1314 = vmatpush1.bf16.xpose.msra.mxu0 0
        %1315 = vmatprep.subr.bf16.mxu0 0
        %1316 = vmatpush1.bf16.xpose.msra.mxu0 0
        %1317 = vmatprep.subr.bf16.mxu0 0
        %1318 = vmatpush1.bf16.xpose.msra.mxu0 0
        %1319 = vmatprep.subr.bf16.mxu0 0
        %1320 = vmatpush1.bf16.xpose.msra.mxu0 0
        %1321 = vmatprep.subr.bf16.mxu0 0
        %1322 = vmatpush1.bf16.xpose.msra.mxu0 0
        %1323 = vmatprep.subr.bf16.mxu0 0
        %1324 = vmatpush1.bf16.xpose.msra.mxu0 0
        %1325 = vmatprep.mubr.bf16.mxu0 0
        %1326 = vmatmul.mubr.bf16.gmra.mrb[0].mxu0 %v1288
        %v1327 = vpop.f32.mrb[0].mxu0
        %v1328 = vadd.f32 %v840, %v1327
        %v1329 = vpop.f32.mrb[0].mxu0
        %v1330 = vpop.f32.mrb[0].mxu0
        %v1331 = vpop.f32.mrb[0].mxu0
        %1332 = vdwg.mxu0
        %1333 = vrot.lane.b32.xlu0 %v842, 112
        %v1334 = vpop.permute.xlu0 %1333
        %1335 = vrot.lane.b32.xlu0 %v842, 80
        %v1336 = vpop.permute.xlu0 %1335
        %v1338 = vsel %vm846, %v1334, 0
        %v1341 = vsel %vm846, %v1336, 0
        %1343 = vmatprep.subr.bf16.mxu0 0
        %1344 = vmatpush1.bf16.xpose.msra.mxu0 %v1341
        %1345 = vmatprep.subr.bf16.mxu0 0
        %1346 = vmatpush1.bf16.xpose.msra.mxu0 0
        %1347 = vmatprep.subr.bf16.mxu0 0
        %1348 = vmatpush1.bf16.xpose.msra.mxu0 0
        %1349 = vmatprep.subr.bf16.mxu0 0
        %1350 = vmatpush1.bf16.xpose.msra.mxu0 0
        %1351 = vmatprep.subr.bf16.mxu0 0
        %1352 = vmatpush1.bf16.xpose.msra.mxu0 0
        %1353 = vmatprep.subr.bf16.mxu0 0
        %1354 = vmatpush1.bf16.xpose.msra.mxu0 0
        %1355 = vmatprep.subr.bf16.mxu0 0
        %1356 = vmatpush1.bf16.xpose.msra.mxu0 0
        %1357 = vmatprep.subr.bf16.mxu0 0
        %1358 = vmatpush1.bf16.xpose.msra.mxu0 0
        %1359 = vmatprep.subr.bf16.mxu0 0
        %1360 = vmatpush1.bf16.xpose.msra.mxu0 0
        %1361 = vmatprep.subr.bf16.mxu0 0
        %1362 = vmatpush1.bf16.xpose.msra.mxu0 0
        %1363 = vmatprep.subr.bf16.mxu0 0
        %1364 = vmatpush1.bf16.xpose.msra.mxu0 0
        %1365 = vmatprep.subr.bf16.mxu0 0
        %1366 = vmatpush1.bf16.xpose.msra.mxu0 0
        %1367 = vmatprep.subr.bf16.mxu0 0
        %1368 = vmatpush1.bf16.xpose.msra.mxu0 0
        %1369 = vmatprep.subr.bf16.mxu0 0
        %1370 = vmatpush1.bf16.xpose.msra.mxu0 0
        %1371 = vmatprep.subr.bf16.mxu0 0
        %1372 = vmatpush1.bf16.xpose.msra.mxu0 0
        %1373 = vmatprep.subr.bf16.mxu0 0
        %1374 = vmatpush1.bf16.xpose.msra.mxu0 0
        %1375 = vmatprep.mubr.bf16.mxu0 0
        %1376 = vmatmul.mubr.bf16.gmra.mrb[0].mxu0 %v1338
        %v1377 = vpop.f32.mrb[0].mxu0
        %v1378 = vadd.f32 %v840, %v1377
        %v1379 = vpop.f32.mrb[0].mxu0
        %v1380 = vpop.f32.mrb[0].mxu0
        %v1381 = vpop.f32.mrb[0].mxu0
        %1382 = vdwg.mxu0
        %v1383 = vsel %vm846, %v1328, -inf
        %1384 = vmax.xlane.f32.xlu0 %v1383
        %v1385 = vpop.xlane.xlu0 %1384
        %v1386 = vsel %vm846, %v1378, -inf
        %1387 = vmax.xlane.f32.xlu0 %v1386
        %v1388 = vpop.xlane.xlu0 %1387
        %v1389 = vsub.f32 %v1328, %v1385
        %v1390 = vsub.f32 %v1378, %v1388
        %v1391 = vmul.f32 %v1389, 1.442695
        %v1392 = vpow.pop %v1391
        %v1393 = vmul.f32 %v1390, 1.442695
        %v1394 = vpow.pop %v1393
        %v1395 = vsel %vm846, %v1392, 0.0
        %1396 = vadd.xlane.f32.xlu0 %v1395
        %v1397 = vpop.xlane.xlu0 %1396
        %v1398 = vsel %vm846, %v1394, 0.0
        %1399 = vadd.xlane.f32.xlu0 %v1398
        %v1400 = vpop.xlane.xlu0 %1399
        %v1401 = vrcp.pop %v1397
        %v1402 = vrcp.pop %v1400
        %v1403 = vmul.f32 %v1392, %v1401
        %v1404 = vmul.f32 %v1394, %v1402
        %v1405 = vpack.c.bf16 %v1403, %v1403
        %v1406 = vpack.c.bf16 %v1404, %v1404
        %1407 = vrot.lane.b32.xlu0 %v841, 48
        %v1408 = vpop.permute.xlu0 %1407
        %v1410 = vsel %vm846, %v1405, 0
        %v1413 = vsel %vm971, %v1408, 0
        %1415 = vmatprep.subr.bf16.mxu0 0
        %1416 = vmatpush1.bf16.msra.mxu0 %v1413
        %1417 = vmatprep.subr.bf16.mxu0 0
        %1418 = vmatpush1.bf16.msra.mxu0 0
        %1419 = vmatprep.subr.bf16.mxu0 0
        %1420 = vmatpush1.bf16.msra.mxu0 0
        %1421 = vmatprep.subr.bf16.mxu0 0
        %1422 = vmatpush1.bf16.msra.mxu0 0
        %1423 = vmatprep.subr.bf16.mxu0 0
        %1424 = vmatpush1.bf16.msra.mxu0 0
        %1425 = vmatprep.subr.bf16.mxu0 0
        %1426 = vmatpush1.bf16.msra.mxu0 0
        %1427 = vmatprep.subr.bf16.mxu0 0
        %1428 = vmatpush1.bf16.msra.mxu0 0
        %1429 = vmatprep.subr.bf16.mxu0 0
        %1430 = vmatpush1.bf16.msra.mxu0 0
        %1431 = vmatprep.subr.bf16.mxu0 0
        %1432 = vmatpush1.bf16.msra.mxu0 0
        %1433 = vmatprep.subr.bf16.mxu0 0
        %1434 = vmatpush1.bf16.msra.mxu0 0
        %1435 = vmatprep.subr.bf16.mxu0 0
        %1436 = vmatpush1.bf16.msra.mxu0 0
        %1437 = vmatprep.subr.bf16.mxu0 0
        %1438 = vmatpush1.bf16.msra.mxu0 0
        %1439 = vmatprep.subr.bf16.mxu0 0
        %1440 = vmatpush1.bf16.msra.mxu0 0
        %1441 = vmatprep.subr.bf16.mxu0 0
        %1442 = vmatpush1.bf16.msra.mxu0 0
        %1443 = vmatprep.subr.bf16.mxu0 0
        %1444 = vmatpush1.bf16.msra.mxu0 0
        %1445 = vmatprep.subr.bf16.mxu0 0
        %1446 = vmatpush1.bf16.msra.mxu0 0
        %1447 = vmatprep.mubr.bf16.mxu0 0
        %1448 = vmatmul.mubr.bf16.gmra.mrb[0].mxu0 %v1410
        %v1449 = vpop.f32.mrb[0].mxu0
        %v1450 = vadd.f32 0.0, %v1449
        %v1451 = vpop.f32.mrb[0].mxu0
        %v1452 = vpop.f32.mrb[0].mxu0
        %v1453 = vpop.f32.mrb[0].mxu0
        %1454 = vdwg.mxu0
        %1455 = vrot.lane.b32.xlu0 %v842, 48
        %v1456 = vpop.permute.xlu0 %1455
        %v1458 = vsel %vm846, %v1406, 0
        %v1461 = vsel %vm971, %v1456, 0
        %1463 = vmatprep.subr.bf16.mxu0 0
        %1464 = vmatpush1.bf16.msra.mxu0 %v1461
        %1465 = vmatprep.subr.bf16.mxu0 0
        %1466 = vmatpush1.bf16.msra.mxu0 0
        %1467 = vmatprep.subr.bf16.mxu0 0
        %1468 = vmatpush1.bf16.msra.mxu0 0
        %1469 = vmatprep.subr.bf16.mxu0 0
        %1470 = vmatpush1.bf16.msra.mxu0 0
        %1471 = vmatprep.subr.bf16.mxu0 0
        %1472 = vmatpush1.bf16.msra.mxu0 0
        %1473 = vmatprep.subr.bf16.mxu0 0
        %1474 = vmatpush1.bf16.msra.mxu0 0
        %1475 = vmatprep.subr.bf16.mxu0 0
        %1476 = vmatpush1.bf16.msra.mxu0 0
        %1477 = vmatprep.subr.bf16.mxu0 0
        %1478 = vmatpush1.bf16.msra.mxu0 0
        %1479 = vmatprep.subr.bf16.mxu0 0
        %1480 = vmatpush1.bf16.msra.mxu0 0
        %1481 = vmatprep.subr.bf16.mxu0 0
        %1482 = vmatpush1.bf16.msra.mxu0 0
        %1483 = vmatprep.subr.bf16.mxu0 0
        %1484 = vmatpush1.bf16.msra.mxu0 0
        %1485 = vmatprep.subr.bf16.mxu0 0
        %1486 = vmatpush1.bf16.msra.mxu0 0
        %1487 = vmatprep.subr.bf16.mxu0 0
        %1488 = vmatpush1.bf16.msra.mxu0 0
        %1489 = vmatprep.subr.bf16.mxu0 0
        %1490 = vmatpush1.bf16.msra.mxu0 0
        %1491 = vmatprep.subr.bf16.mxu0 0
        %1492 = vmatpush1.bf16.msra.mxu0 0
        %1493 = vmatprep.subr.bf16.mxu0 0
        %1494 = vmatpush1.bf16.msra.mxu0 0
        %1495 = vmatprep.mubr.bf16.mxu0 0
        %1496 = vmatmul.mubr.bf16.gmra.mrb[0].mxu0 %v1458
        %v1497 = vpop.f32.mrb[0].mxu0
        %v1498 = vadd.f32 0.0, %v1497
        %v1499 = vpop.f32.mrb[0].mxu0
        %v1500 = vpop.f32.mrb[0].mxu0
        %v1501 = vpop.f32.mrb[0].mxu0
        %1502 = vdwg.mxu0
        %1503 = vrot.lane.b32.xlu0 %v841, 104
        %v1504 = vpop.permute.xlu0 %1503
        %1505 = vrot.lane.b32.xlu0 %v841, 72
        %v1506 = vpop.permute.xlu0 %1505
        %v1508 = vsel %vm846, %v1504, 0
        %v1511 = vsel %vm846, %v1506, 0
        %1513 = vmatprep.subr.bf16.mxu0 0
        %1514 = vmatpush1.bf16.xpose.msra.mxu0 %v1511
        %1515 = vmatprep.subr.bf16.mxu0 0
        %1516 = vmatpush1.bf16.xpose.msra.mxu0 0
        %1517 = vmatprep.subr.bf16.mxu0 0
        %1518 = vmatpush1.bf16.xpose.msra.mxu0 0
        %1519 = vmatprep.subr.bf16.mxu0 0
        %1520 = vmatpush1.bf16.xpose.msra.mxu0 0
        %1521 = vmatprep.subr.bf16.mxu0 0
        %1522 = vmatpush1.bf16.xpose.msra.mxu0 0
        %1523 = vmatprep.subr.bf16.mxu0 0
        %1524 = vmatpush1.bf16.xpose.msra.mxu0 0
        %1525 = vmatprep.subr.bf16.mxu0 0
        %1526 = vmatpush1.bf16.xpose.msra.mxu0 0
        %1527 = vmatprep.subr.bf16.mxu0 0
        %1528 = vmatpush1.bf16.xpose.msra.mxu0 0
        %1529 = vmatprep.subr.bf16.mxu0 0
        %1530 = vmatpush1.bf16.xpose.msra.mxu0 0
        %1531 = vmatprep.subr.bf16.mxu0 0
        %1532 = vmatpush1.bf16.xpose.msra.mxu0 0
        %1533 = vmatprep.subr.bf16.mxu0 0
        %1534 = vmatpush1.bf16.xpose.msra.mxu0 0
        %1535 = vmatprep.subr.bf16.mxu0 0
        %1536 = vmatpush1.bf16.xpose.msra.mxu0 0
        %1537 = vmatprep.subr.bf16.mxu0 0
        %1538 = vmatpush1.bf16.xpose.msra.mxu0 0
        %1539 = vmatprep.subr.bf16.mxu0 0
        %1540 = vmatpush1.bf16.xpose.msra.mxu0 0
        %1541 = vmatprep.subr.bf16.mxu0 0
        %1542 = vmatpush1.bf16.xpose.msra.mxu0 0
        %1543 = vmatprep.subr.bf16.mxu0 0
        %1544 = vmatpush1.bf16.xpose.msra.mxu0 0
        %1545 = vmatprep.mubr.bf16.mxu0 0
        %1546 = vmatmul.mubr.bf16.gmra.mrb[0].mxu0 %v1508
        %v1547 = vpop.f32.mrb[0].mxu0
        %v1548 = vadd.f32 %v840, %v1547
        %v1549 = vpop.f32.mrb[0].mxu0
        %v1550 = vpop.f32.mrb[0].mxu0
        %v1551 = vpop.f32.mrb[0].mxu0
        %1552 = vdwg.mxu0
        %1553 = vrot.lane.b32.xlu0 %v842, 104
        %v1554 = vpop.permute.xlu0 %1553
        %1555 = vrot.lane.b32.xlu0 %v842, 72
        %v1556 = vpop.permute.xlu0 %1555
        %v1558 = vsel %vm846, %v1554, 0
        %v1561 = vsel %vm846, %v1556, 0
        %1563 = vmatprep.subr.bf16.mxu0 0
        %1564 = vmatpush1.bf16.xpose.msra.mxu0 %v1561
        %1565 = vmatprep.subr.bf16.mxu0 0
        %1566 = vmatpush1.bf16.xpose.msra.mxu0 0
        %1567 = vmatprep.subr.bf16.mxu0 0
        %1568 = vmatpush1.bf16.xpose.msra.mxu0 0
        %1569 = vmatprep.subr.bf16.mxu0 0
        %1570 = vmatpush1.bf16.xpose.msra.mxu0 0
        %1571 = vmatprep.subr.bf16.mxu0 0
        %1572 = vmatpush1.bf16.xpose.msra.mxu0 0
        %1573 = vmatprep.subr.bf16.mxu0 0
        %1574 = vmatpush1.bf16.xpose.msra.mxu0 0
        %1575 = vmatprep.subr.bf16.mxu0 0
        %1576 = vmatpush1.bf16.xpose.msra.mxu0 0
        %1577 = vmatprep.subr.bf16.mxu0 0
        %1578 = vmatpush1.bf16.xpose.msra.mxu0 0
        %1579 = vmatprep.subr.bf16.mxu0 0
        %1580 = vmatpush1.bf16.xpose.msra.mxu0 0
        %1581 = vmatprep.subr.bf16.mxu0 0
        %1582 = vmatpush1.bf16.xpose.msra.mxu0 0
        %1583 = vmatprep.subr.bf16.mxu0 0
        %1584 = vmatpush1.bf16.xpose.msra.mxu0 0
        %1585 = vmatprep.subr.bf16.mxu0 0
        %1586 = vmatpush1.bf16.xpose.msra.mxu0 0
        %1587 = vmatprep.subr.bf16.mxu0 0
        %1588 = vmatpush1.bf16.xpose.msra.mxu0 0
        %1589 = vmatprep.subr.bf16.mxu0 0
        %1590 = vmatpush1.bf16.xpose.msra.mxu0 0
        %1591 = vmatprep.subr.bf16.mxu0 0
        %1592 = vmatpush1.bf16.xpose.msra.mxu0 0
        %1593 = vmatprep.subr.bf16.mxu0 0
        %1594 = vmatpush1.bf16.xpose.msra.mxu0 0
        %1595 = vmatprep.mubr.bf16.mxu0 0
        %1596 = vmatmul.mubr.bf16.gmra.mrb[0].mxu0 %v1558
        %v1597 = vpop.f32.mrb[0].mxu0
        %v1598 = vadd.f32 %v840, %v1597
        %v1599 = vpop.f32.mrb[0].mxu0
        %v1600 = vpop.f32.mrb[0].mxu0
        %v1601 = vpop.f32.mrb[0].mxu0
        %1602 = vdwg.mxu0
        %v1603 = vsel %vm846, %v1548, -inf
        %1604 = vmax.xlane.f32.xlu0 %v1603
        %v1605 = vpop.xlane.xlu0 %1604
        %v1606 = vsel %vm846, %v1598, -inf
        %1607 = vmax.xlane.f32.xlu0 %v1606
        %v1608 = vpop.xlane.xlu0 %1607
        %v1609 = vsub.f32 %v1548, %v1605
        %v1610 = vsub.f32 %v1598, %v1608
        %v1611 = vmul.f32 %v1609, 1.442695
        %v1612 = vpow.pop %v1611
        %v1613 = vmul.f32 %v1610, 1.442695
        %v1614 = vpow.pop %v1613
        %v1615 = vsel %vm846, %v1612, 0.0
        %1616 = vadd.xlane.f32.xlu0 %v1615
        %v1617 = vpop.xlane.xlu0 %1616
        %v1618 = vsel %vm846, %v1614, 0.0
        %1619 = vadd.xlane.f32.xlu0 %v1618
        %v1620 = vpop.xlane.xlu0 %1619
        %v1621 = vrcp.pop %v1617
        %v1622 = vrcp.pop %v1620
        %v1623 = vmul.f32 %v1612, %v1621
        %v1624 = vmul.f32 %v1614, %v1622
        %v1625 = vpack.c.bf16 %v1623, %v1623
        %v1626 = vpack.c.bf16 %v1624, %v1624
        %1627 = vrot.lane.b32.xlu0 %v841, 40
        %v1628 = vpop.permute.xlu0 %1627
        %v1630 = vsel %vm846, %v1625, 0
        %v1633 = vsel %vm971, %v1628, 0
        %1635 = vmatprep.subr.bf16.mxu0 0
        %1636 = vmatpush1.bf16.msra.mxu0 %v1633
        %1637 = vmatprep.subr.bf16.mxu0 0
        %1638 = vmatpush1.bf16.msra.mxu0 0
        %1639 = vmatprep.subr.bf16.mxu0 0
        %1640 = vmatpush1.bf16.msra.mxu0 0
        %1641 = vmatprep.subr.bf16.mxu0 0
        %1642 = vmatpush1.bf16.msra.mxu0 0
        %1643 = vmatprep.subr.bf16.mxu0 0
        %1644 = vmatpush1.bf16.msra.mxu0 0
        %1645 = vmatprep.subr.bf16.mxu0 0
        %1646 = vmatpush1.bf16.msra.mxu0 0
        %1647 = vmatprep.subr.bf16.mxu0 0
        %1648 = vmatpush1.bf16.msra.mxu0 0
        %1649 = vmatprep.subr.bf16.mxu0 0
        %1650 = vmatpush1.bf16.msra.mxu0 0
        %1651 = vmatprep.subr.bf16.mxu0 0
        %1652 = vmatpush1.bf16.msra.mxu0 0
        %1653 = vmatprep.subr.bf16.mxu0 0
        %1654 = vmatpush1.bf16.msra.mxu0 0
        %1655 = vmatprep.subr.bf16.mxu0 0
        %1656 = vmatpush1.bf16.msra.mxu0 0
        %1657 = vmatprep.subr.bf16.mxu0 0
        %1658 = vmatpush1.bf16.msra.mxu0 0
        %1659 = vmatprep.subr.bf16.mxu0 0
        %1660 = vmatpush1.bf16.msra.mxu0 0
        %1661 = vmatprep.subr.bf16.mxu0 0
        %1662 = vmatpush1.bf16.msra.mxu0 0
        %1663 = vmatprep.subr.bf16.mxu0 0
        %1664 = vmatpush1.bf16.msra.mxu0 0
        %1665 = vmatprep.subr.bf16.mxu0 0
        %1666 = vmatpush1.bf16.msra.mxu0 0
        %1667 = vmatprep.mubr.bf16.mxu0 0
        %1668 = vmatmul.mubr.bf16.gmra.mrb[0].mxu0 %v1630
        %v1669 = vpop.f32.mrb[0].mxu0
        %v1670 = vadd.f32 0.0, %v1669
        %v1671 = vpop.f32.mrb[0].mxu0
        %v1672 = vpop.f32.mrb[0].mxu0
        %v1673 = vpop.f32.mrb[0].mxu0
        %1674 = vdwg.mxu0
        %1675 = vrot.lane.b32.xlu0 %v842, 40
        %v1676 = vpop.permute.xlu0 %1675
        %v1678 = vsel %vm846, %v1626, 0
        %v1681 = vsel %vm971, %v1676, 0
        %1683 = vmatprep.subr.bf16.mxu0 0
        %1684 = vmatpush1.bf16.msra.mxu0 %v1681
        %1685 = vmatprep.subr.bf16.mxu0 0
        %1686 = vmatpush1.bf16.msra.mxu0 0
        %1687 = vmatprep.subr.bf16.mxu0 0
        %1688 = vmatpush1.bf16.msra.mxu0 0
        %1689 = vmatprep.subr.bf16.mxu0 0
        %1690 = vmatpush1.bf16.msra.mxu0 0
        %1691 = vmatprep.subr.bf16.mxu0 0
        %1692 = vmatpush1.bf16.msra.mxu0 0
        %1693 = vmatprep.subr.bf16.mxu0 0
        %1694 = vmatpush1.bf16.msra.mxu0 0
        %1695 = vmatprep.subr.bf16.mxu0 0
        %1696 = vmatpush1.bf16.msra.mxu0 0
        %1697 = vmatprep.subr.bf16.mxu0 0
        %1698 = vmatpush1.bf16.msra.mxu0 0
        %1699 = vmatprep.subr.bf16.mxu0 0
        %1700 = vmatpush1.bf16.msra.mxu0 0
        %1701 = vmatprep.subr.bf16.mxu0 0
        %1702 = vmatpush1.bf16.msra.mxu0 0
        %1703 = vmatprep.subr.bf16.mxu0 0
        %1704 = vmatpush1.bf16.msra.mxu0 0
        %1705 = vmatprep.subr.bf16.mxu0 0
        %1706 = vmatpush1.bf16.msra.mxu0 0
        %1707 = vmatprep.subr.bf16.mxu0 0
        %1708 = vmatpush1.bf16.msra.mxu0 0
        %1709 = vmatprep.subr.bf16.mxu0 0
        %1710 = vmatpush1.bf16.msra.mxu0 0
        %1711 = vmatprep.subr.bf16.mxu0 0
        %1712 = vmatpush1.bf16.msra.mxu0 0
        %1713 = vmatprep.subr.bf16.mxu0 0
        %1714 = vmatpush1.bf16.msra.mxu0 0
        %1715 = vmatprep.mubr.bf16.mxu0 0
        %1716 = vmatmul.mubr.bf16.gmra.mrb[0].mxu0 %v1678
        %v1717 = vpop.f32.mrb[0].mxu0
        %v1718 = vadd.f32 0.0, %v1717
        %v1719 = vpop.f32.mrb[0].mxu0
        %v1720 = vpop.f32.mrb[0].mxu0
        %v1721 = vpop.f32.mrb[0].mxu0
        %1722 = vdwg.mxu0
        %1725 = vrot.lane.b32.xlu0 %v1230, 8
        %v1726 = vpop.permute.xlu0 %1725
        %1727 = vrot.lane.b32.xlu0 %v1278, 8
        %v1728 = vpop.permute.xlu0 %1727
        %1733 = vrot.lane.b32.xlu0 %v1450, 16
        %v1734 = vpop.permute.xlu0 %1733
        %1735 = vrot.lane.b32.xlu0 %v1498, 16
        %v1736 = vpop.permute.xlu0 %1735
        %1741 = vrot.lane.b32.xlu0 %v1670, 24
        %v1742 = vpop.permute.xlu0 %1741
        %1743 = vrot.lane.b32.xlu0 %v1718, 24
        %v1744 = vpop.permute.xlu0 %1743
        %v1747 = vsel %vm846, %v1010, %v1726
        %v1748 = vsel %vm846, %v1058, %v1728
        %vm1749 = vcmask 130048
        %v1750 = vsel %vm1749, %v1747, %v1734
        %v1751 = vsel %vm1749, %v1748, %v1736
        %vm1752 = vcmask 195584
        %v1753 = vsel %vm1752, %v1750, %v1742
        %v1754 = vsel %vm1752, %v1751, %v1744
        %v1755 = vpack.c.bf16 %v1754, %v1753
        %v1756 = vld [vmem:[%s688] sm:$0xf]
        %v1757 = vld [vmem:[%s688 + $0x4] sm:$0xf]
        %v1758 = vld [vmem:[%s688 + $0x8] sm:$0xf]
        %v1759 = vld [vmem:[%s688 + $0xc] sm:$0xf]
        %v1760 = vld [vmem:[%s691] sm:$0x1]
        %v1762 = vlaneseq
        %v1763 = vshrl.u32 %v1762, 7
        %v1764 = vsub.s32 0, %v1763
        %v1765 = vrot.slane %v1760, %v1764
        %v1771 = vunpack.c.l.b16 %v1756
        %v1772 = vunpack.c.l.b16 %v1757
        %v1773 = vunpack.c.l.b16 %v1758
        %v1774 = vunpack.c.l.b16 %v1759
        %v1775 = vpack.c.b16 %v1772, %v1771
        %v1776 = vpack.c.b16 %v1774, %v1773
        %v1780 = vsel %vm728, %v1755, 0
        %1782 = vmatprep.subr.bf16.mxu0 0
        %1783 = vmatpush1.bf16.msra.mxu0 %v1775
        %1784 = vmatprep.subr.bf16.mxu0 0
        %1785 = vmatpush1.bf16.msra.mxu0 %v1776
        %1786 = vmatprep.subr.bf16.mxu0 0
        %1787 = vmatpush1.bf16.msra.mxu0 0
        %1788 = vmatprep.subr.bf16.mxu0 0
        %1789 = vmatpush1.bf16.msra.mxu0 0
        %1790 = vmatprep.subr.bf16.mxu0 0
        %1791 = vmatpush1.bf16.msra.mxu0 0
        %1792 = vmatprep.subr.bf16.mxu0 0
        %1793 = vmatpush1.bf16.msra.mxu0 0
        %1794 = vmatprep.subr.bf16.mxu0 0
        %1795 = vmatpush1.bf16.msra.mxu0 0
        %1796 = vmatprep.subr.bf16.mxu0 0
        %1797 = vmatpush1.bf16.msra.mxu0 0
        %1798 = vmatprep.subr.bf16.mxu0 0
        %1799 = vmatpush1.bf16.msra.mxu0 0
        %1800 = vmatprep.subr.bf16.mxu0 0
        %1801 = vmatpush1.bf16.msra.mxu0 0
        %1802 = vmatprep.subr.bf16.mxu0 0
        %1803 = vmatpush1.bf16.msra.mxu0 0
        %1804 = vmatprep.subr.bf16.mxu0 0
        %1805 = vmatpush1.bf16.msra.mxu0 0
        %1806 = vmatprep.subr.bf16.mxu0 0
        %1807 = vmatpush1.bf16.msra.mxu0 0
        %1808 = vmatprep.subr.bf16.mxu0 0
        %1809 = vmatpush1.bf16.msra.mxu0 0
        %1810 = vmatprep.subr.bf16.mxu0 0
        %1811 = vmatpush1.bf16.msra.mxu0 0
        %1812 = vmatprep.subr.bf16.mxu0 0
        %1813 = vmatpush1.bf16.msra.mxu0 0
        %1814 = vmatprep.mubr.bf16.mxu0 0
        %1815 = vmatmul.mubr.bf16.gmra.mrb[0].mxu0 %v1780
        %v1816 = vpop.f32.mrb[0].mxu0
        %v1817 = vadd.f32 %v1765, %v1816
        %v1818 = vpop.f32.mrb[0].mxu0
        %v1819 = vpop.f32.mrb[0].mxu0
        %v1820 = vadd.f32 %v1765, %v1819
        %v1821 = vpop.f32.mrb[0].mxu0
        %1822 = vdwg.mxu0
        %v1823 = vadd.f32 %v724, %v1817
        %v1824 = vadd.f32 %v725, %v1820
        %v1825 = vld [vmem:[%s694] sm:$0x1]
        %v1826 = vld [vmem:[%s697] sm:$0x1]
        %v1827 = vsel %vm728, %v1823, 0.0
        %1828 = vadd.xlane.f32.xlu0 %v1827
        %v1829 = vpop.xlane.xlu0 %1828
        %v1830 = vsel %vm728, %v1824, 0.0
        %1831 = vadd.xlane.f32.xlu0 %v1830
        %v1832 = vpop.xlane.xlu0 %1831
        %v1833 = vmul.f32 %v1829, %v735
        %v1834 = vmul.f32 %v1832, %v735
        %v1835 = vsub.f32 %v1823, %v1833
        %v1836 = vsub.f32 %v1824, %v1834
        %v1837 = vmul.f32 %v1835, %v1835
        %v1838 = vmul.f32 %v1836, %v1836
        %v1839 = vsel %vm728, %v1837, 0.0
        %1840 = vadd.xlane.f32.xlu0 %v1839
        %v1841 = vpop.xlane.xlu0 %1840
        %v1842 = vsel %vm728, %v1838, 0.0
        %1843 = vadd.xlane.f32.xlu0 %v1842
        %v1844 = vpop.xlane.xlu0 %1843
        %v1845 = vmul.f32 %v1841, %v735
        %v1846 = vmul.f32 %v1844, %v735
        %v1847 = vadd.f32 %v1845, 1e-05
        %v1848 = vadd.f32 %v1846, 1e-05
        %v1849 = vrsqrt.pop %v1847
        %v1850 = vrsqrt.pop %v1848
        %v1851 = vmul.f32 %v1835, %v1849
        %v1852 = vmul.f32 %v1836, %v1850
        %v1854 = vlaneseq
        %v1855 = vshrl.u32 %v1854, 7
        %v1856 = vsub.s32 0, %v1855
        %v1857 = vrot.slane %v1825, %v1856
        %v1859 = vmul.f32 %v1851, %v1857
        %v1860 = vmul.f32 %v1852, %v1857
        %v1862 = vlaneseq
        %v1863 = vshrl.u32 %v1862, 7
        %v1864 = vsub.s32 0, %v1863
        %v1865 = vrot.slane %v1826, %v1864
        %v1867 = vadd.f32 %v1859, %v1865
        %v1868 = vadd.f32 %v1860, %v1865
        %v1869 = vpack.c.bf16 %v1868, %v1867
        %v1870 = vld [vmem:[%s702] sm:$0xf]
        %v1871 = vld [vmem:[%s702 + $0x4] sm:$0xf]
        %v1872 = vld [vmem:[%s702 + $0x8] sm:$0xf]
        %v1873 = vld [vmem:[%s702 + $0xc] sm:$0xf]
        %v1874 = vld [vmem:[%s705] sm:$0x1]
        %v1876 = vlaneseq
        %v1877 = vshrl.u32 %v1876, 7
        %v1878 = vsub.s32 0, %v1877
        %v1879 = vrot.slane %v1874, %v1878
        %v1885 = vunpack.c.l.b16 %v1870
        %v1886 = vunpack.c.l.b16 %v1871
        %v1887 = vunpack.c.l.b16 %v1872
        %v1888 = vunpack.c.l.b16 %v1873
        %v1889 = vpack.c.b16 %v1886, %v1885
        %v1890 = vpack.c.b16 %v1888, %v1887
        %v1894 = vsel %vm728, %v1869, 0
        %1896 = vmatprep.subr.bf16.mxu0 0
        %1897 = vmatpush1.bf16.msra.mxu0 %v1889
        %1898 = vmatprep.subr.bf16.mxu0 0
        %1899 = vmatpush1.bf16.msra.mxu0 %v1890
        %1900 = vmatprep.subr.bf16.mxu0 0
        %1901 = vmatpush1.bf16.msra.mxu0 0
        %1902 = vmatprep.subr.bf16.mxu0 0
        %1903 = vmatpush1.bf16.msra.mxu0 0
        %1904 = vmatprep.subr.bf16.mxu0 0
        %1905 = vmatpush1.bf16.msra.mxu0 0
        %1906 = vmatprep.subr.bf16.mxu0 0
        %1907 = vmatpush1.bf16.msra.mxu0 0
        %1908 = vmatprep.subr.bf16.mxu0 0
        %1909 = vmatpush1.bf16.msra.mxu0 0
        %1910 = vmatprep.subr.bf16.mxu0 0
        %1911 = vmatpush1.bf16.msra.mxu0 0
        %1912 = vmatprep.subr.bf16.mxu0 0
        %1913 = vmatpush1.bf16.msra.mxu0 0
        %1914 = vmatprep.subr.bf16.mxu0 0
        %1915 = vmatpush1.bf16.msra.mxu0 0
        %1916 = vmatprep.subr.bf16.mxu0 0
        %1917 = vmatpush1.bf16.msra.mxu0 0
        %1918 = vmatprep.subr.bf16.mxu0 0
        %1919 = vmatpush1.bf16.msra.mxu0 0
        %1920 = vmatprep.subr.bf16.mxu0 0
        %1921 = vmatpush1.bf16.msra.mxu0 0
        %1922 = vmatprep.subr.bf16.mxu0 0
        %1923 = vmatpush1.bf16.msra.mxu0 0
        %1924 = vmatprep.subr.bf16.mxu0 0
        %1925 = vmatpush1.bf16.msra.mxu0 0
        %1926 = vmatprep.subr.bf16.mxu0 0
        %1927 = vmatpush1.bf16.msra.mxu0 0
        %1928 = vmatprep.mubr.bf16.mxu0 0
        %1929 = vmatmul.mubr.bf16.gmra.mrb[0].mxu0 %v1894
        %v1930 = vpop.f32.mrb[0].mxu0
        %v1931 = vadd.f32 %v1879, %v1930
        %v1932 = vpop.f32.mrb[0].mxu0
        %v1933 = vpop.f32.mrb[0].mxu0
        %v1934 = vadd.f32 %v1879, %v1933
        %v1935 = vpop.f32.mrb[0].mxu0
        %1936 = vdwg.mxu0
        %v1937 = vmul.f32 %v1931, 1.702
        %v1938 = vmul.f32 %v1934, 1.702
        %v1939 = vxor.u32 %v1937, 2147483648
        %v1940 = vxor.u32 %v1938, 2147483648
        %v1941 = vmul.f32 %v1939, 1.442695
        %v1942 = vpow.pop %v1941
        %v1943 = vmul.f32 %v1940, 1.442695
        %v1944 = vpow.pop %v1943
        %v1945 = vadd.f32 %v1942, 1.0
        %v1946 = vadd.f32 %v1944, 1.0
        %v1947 = vrcp.pop %v1945
        %v1948 = vmul.f32 1.0, %v1947
        %v1949 = vrcp.pop %v1946
        %v1950 = vmul.f32 1.0, %v1949
        %v1951 = vmul.f32 %v1931, %v1948
        %v1952 = vmul.f32 %v1934, %v1950
        %v1953 = vpack.c.bf16 %v1952, %v1951
        %v1954 = vld [vmem:[%s710] sm:$0xf]
        %v1955 = vld [vmem:[%s710 + $0x4] sm:$0xf]
        %v1956 = vld [vmem:[%s710 + $0x8] sm:$0xf]
        %v1957 = vld [vmem:[%s710 + $0xc] sm:$0xf]
        %v1958 = vld [vmem:[%s710 + $0x10] sm:$0xf]
        %v1959 = vld [vmem:[%s710 + $0x14] sm:$0xf]
        %v1960 = vld [vmem:[%s710 + $0x18] sm:$0xf]
        %v1961 = vld [vmem:[%s710 + $0x1c] sm:$0xf]
        %v1962 = vld [vmem:[%s710 + $0x20] sm:$0xf]
        %v1963 = vld [vmem:[%s710 + $0x24] sm:$0xf]
        %v1964 = vld [vmem:[%s710 + $0x28] sm:$0xf]
        %v1965 = vld [vmem:[%s710 + $0x2c] sm:$0xf]
        %v1966 = vld [vmem:[%s710 + $0x30] sm:$0xf]
        %v1967 = vld [vmem:[%s710 + $0x34] sm:$0xf]
        %v1968 = vld [vmem:[%s710 + $0x38] sm:$0xf]
        %v1969 = vld [vmem:[%s710 + $0x3c] sm:$0xf]
        %v1970 = vld [vmem:[%s713] sm:$0x1]
        %v1972 = vlaneseq
        %v1973 = vshrl.u32 %v1972, 7
        %v1974 = vsub.s32 0, %v1973
        %v1975 = vrot.slane %v1970, %v1974
        %v1993 = vunpack.c.l.b16 %v1954
        %v1994 = vunpack.c.l.b16 %v1955
        %v1995 = vunpack.c.l.b16 %v1956
        %v1996 = vunpack.c.l.b16 %v1957
        %v1997 = vunpack.c.l.b16 %v1958
        %v1998 = vunpack.c.l.b16 %v1959
        %v1999 = vunpack.c.l.b16 %v1960
        %v2000 = vunpack.c.l.b16 %v1961
        %v2001 = vunpack.c.l.b16 %v1962
        %v2002 = vunpack.c.l.b16 %v1963
        %v2003 = vunpack.c.l.b16 %v1964
        %v2004 = vunpack.c.l.b16 %v1965
        %v2005 = vunpack.c.l.b16 %v1966
        %v2006 = vunpack.c.l.b16 %v1967
        %v2007 = vunpack.c.l.b16 %v1968
        %v2008 = vunpack.c.l.b16 %v1969
        %v2009 = vpack.c.b16 %v1994, %v1993
        %v2010 = vpack.c.b16 %v1996, %v1995
        %v2011 = vpack.c.b16 %v1998, %v1997
        %v2012 = vpack.c.b16 %v2000, %v1999
        %v2013 = vpack.c.b16 %v2002, %v2001
        %v2014 = vpack.c.b16 %v2004, %v2003
        %v2015 = vpack.c.b16 %v2006, %v2005
        %v2016 = vpack.c.b16 %v2008, %v2007
        %2025 = vmatprep.subr.bf16.mxu0 0
        %2026 = vmatpush1.bf16.msra.mxu0 %v2009
        %2027 = vmatprep.subr.bf16.mxu0 0
        %2028 = vmatpush1.bf16.msra.mxu0 %v2010
        %2029 = vmatprep.subr.bf16.mxu0 0
        %2030 = vmatpush1.bf16.msra.mxu0 %v2011
        %2031 = vmatprep.subr.bf16.mxu0 0
        %2032 = vmatpush1.bf16.msra.mxu0 %v2012
        %2033 = vmatprep.subr.bf16.mxu0 0
        %2034 = vmatpush1.bf16.msra.mxu0 %v2013
        %2035 = vmatprep.subr.bf16.mxu0 0
        %2036 = vmatpush1.bf16.msra.mxu0 %v2014
        %2037 = vmatprep.subr.bf16.mxu0 0
        %2038 = vmatpush1.bf16.msra.mxu0 %v2015
        %2039 = vmatprep.subr.bf16.mxu0 0
        %2040 = vmatpush1.bf16.msra.mxu0 %v2016
        %2041 = vmatprep.subr.bf16.mxu0 0
        %2042 = vmatpush1.bf16.msra.mxu0 0
        %2043 = vmatprep.subr.bf16.mxu0 0
        %2044 = vmatpush1.bf16.msra.mxu0 0
        %2045 = vmatprep.subr.bf16.mxu0 0
        %2046 = vmatpush1.bf16.msra.mxu0 0
        %2047 = vmatprep.subr.bf16.mxu0 0
        %2048 = vmatpush1.bf16.msra.mxu0 0
        %2049 = vmatprep.subr.bf16.mxu0 0
        %2050 = vmatpush1.bf16.msra.mxu0 0
        %2051 = vmatprep.subr.bf16.mxu0 0
        %2052 = vmatpush1.bf16.msra.mxu0 0
        %2053 = vmatprep.subr.bf16.mxu0 0
        %2054 = vmatpush1.bf16.msra.mxu0 0
        %2055 = vmatprep.subr.bf16.mxu0 0
        %2056 = vmatpush1.bf16.msra.mxu0 0
        %2057 = vmatprep.mubr.bf16.mxu0 0
        %2058 = vmatmul.mubr.bf16.gmra.mrb[0].mxu0 %v1953
        %v2059 = vpop.f32.mrb[0].mxu0
        %v2060 = vadd.f32 %v1975, %v2059
        %v2061 = vpop.f32.mrb[0].mxu0
        %v2062 = vpop.f32.mrb[0].mxu0
        %v2063 = vadd.f32 %v1975, %v2062
        %v2064 = vpop.f32.mrb[0].mxu0
        %2065 = vdwg.mxu0
        %v2066 = vadd.f32 %v1823, %v2060
        %v2067 = vadd.f32 %v1824, %v2063
        %2068 = vst.msk [vmem:[#allocation2] sm:$0xff] %vm728, %v2066
        %2069 = vst.msk [vmem:[#allocation2 + $0x8] sm:$0xff] %vm728, %v2067
        %p2070 = scmp.eq.s32.totalorder %s36, 1
        // Predicated region
        $region93: #{tpu_custom_call.1} parent=87 // pred_check
          %p2071 = pneg %p2070
        $region94: #{tpu_custom_call.1} parent=87 // pred_check_branch
          %2073 = sbr.rel (%p2071) target = $region96
        $region95: #{tpu_custom_call.1} parent=87 // pred_region
          %s2074 = sld [smem:[#allocation4]]
          %s2075 = scalar_lea.vmem [#allocation2], %s2074
          %v2076 = vld [vmem:[%s2075] sm:$0x1]
          %s2077 = sld [smem:[#allocation4 + $0x1]]
          %s2078 = sadd.s32 %s2077, 8
          %s2079 = scalar_lea.vmem [#allocation2], %s2078
          %v2080 = vld [vmem:[%s2079] sm:$0x1]
          %v2082 = vrot.slane %v2080, 7
          %vm2084 = vcmask 1040384
          %v2085 = vsel %vm2084, %v2076, %v2082
          %v2086 = vld [vmem:[%s15] sm:$0x1]
          %v2087 = vld [vmem:[%s16] sm:$0x1]
          %vm2088 = vcmask 254976
          %v2089 = vsel %vm2088, %v2085, 0.0
          %2090 = vadd.xlane.f32.xlu0 %v2089
          %v2091 = vpop.xlane.xlu0 %2090
          %v2092 = vmul.f32 %v2091, %v735
          %v2093 = vsub.f32 %v2085, %v2092
          %v2094 = vmul.f32 %v2093, %v2093
          %v2095 = vsel %vm2088, %v2094, 0.0
          %2096 = vadd.xlane.f32.xlu0 %v2095
          %v2097 = vpop.xlane.xlu0 %2096
          %v2098 = vmul.f32 %v2097, %v735
          %v2099 = vadd.f32 %v2098, 1e-05
          %v2100 = vrsqrt.pop %v2099
          %v2101 = vmul.f32 %v2093, %v2100
          %v2103 = vlaneseq
          %v2104 = vshrl.u32 %v2103, 7
          %v2105 = vsub.s32 0, %v2104
          %v2106 = vrot.slane %v2086, %v2105
          %v2108 = vmul.f32 %v2101, %v2106
          %v2110 = vlaneseq
          %v2111 = vshrl.u32 %v2110, 7
          %v2112 = vsub.s32 0, %v2111
          %v2113 = vrot.slane %v2087, %v2112
          %v2115 = vadd.f32 %v2108, %v2113
          %v2116 = vpack.c.bf16 %v2115, %v2115
          %v2117 = vld [vmem:[%s17] sm:$0xf]
          %v2118 = vld [vmem:[%s17 + $0x4] sm:$0xf]
          %v2119 = vld [vmem:[%s17 + $0x8] sm:$0xf]
          %v2120 = vld [vmem:[%s17 + $0xc] sm:$0xf]
          %v2125 = vunpack.c.l.b16 %v2117
          %v2126 = vunpack.c.l.b16 %v2118
          %v2127 = vunpack.c.l.b16 %v2119
          %v2128 = vunpack.c.l.b16 %v2120
          %v2129 = vpack.c.b16 %v2126, %v2125
          %v2130 = vpack.c.b16 %v2128, %v2127
          %v2134 = vsel %vm728, %v2116, 0
          %2136 = vmatprep.subr.bf16.mxu0 0
          %2137 = vmatpush1.bf16.msra.mxu0 %v2129
          %2138 = vmatprep.subr.bf16.mxu0 0
          %2139 = vmatpush1.bf16.msra.mxu0 %v2130
          %2140 = vmatprep.subr.bf16.mxu0 0
          %2141 = vmatpush1.bf16.msra.mxu0 0
          %2142 = vmatprep.subr.bf16.mxu0 0
          %2143 = vmatpush1.bf16.msra.mxu0 0
          %2144 = vmatprep.subr.bf16.mxu0 0
          %2145 = vmatpush1.bf16.msra.mxu0 0
          %2146 = vmatprep.subr.bf16.mxu0 0
          %2147 = vmatpush1.bf16.msra.mxu0 0
          %2148 = vmatprep.subr.bf16.mxu0 0
          %2149 = vmatpush1.bf16.msra.mxu0 0
          %2150 = vmatprep.subr.bf16.mxu0 0
          %2151 = vmatpush1.bf16.msra.mxu0 0
          %2152 = vmatprep.subr.bf16.mxu0 0
          %2153 = vmatpush1.bf16.msra.mxu0 0
          %2154 = vmatprep.subr.bf16.mxu0 0
          %2155 = vmatpush1.bf16.msra.mxu0 0
          %2156 = vmatprep.subr.bf16.mxu0 0
          %2157 = vmatpush1.bf16.msra.mxu0 0
          %2158 = vmatprep.subr.bf16.mxu0 0
          %2159 = vmatpush1.bf16.msra.mxu0 0
          %2160 = vmatprep.subr.bf16.mxu0 0
          %2161 = vmatpush1.bf16.msra.mxu0 0
          %2162 = vmatprep.subr.bf16.mxu0 0
          %2163 = vmatpush1.bf16.msra.mxu0 0
          %2164 = vmatprep.subr.bf16.mxu0 0
          %2165 = vmatpush1.bf16.msra.mxu0 0
          %2166 = vmatprep.subr.bf16.mxu0 0
          %2167 = vmatpush1.bf16.msra.mxu0 0
          %2168 = vmatprep.mubr.bf16.mxu0 0
          %2169 = vmatmul.mubr.bf16.gmra.mrb[0].mxu0 %v2134
          %v2170 = vpop.f32.mrb[0].mxu0
          %v2171 = vadd.f32 0.0, %v2170
          %v2172 = vpop.f32.mrb[0].mxu0
          %v2173 = vpop.f32.mrb[0].mxu0
          %v2174 = vpop.f32.mrb[0].mxu0
          %2175 = vdwg.mxu0
          %v2176 = vmul.f32 %v2171, %v2171
          %v2177 = vsel %vm2088, %v2176, 0.0
          %2178 = vadd.xlane.f32.xlu0 %v2177
          %v2179 = vpop.xlane.xlu0 %2178
          %v2180 = vadd.f32 %v2179, 1e-12
          %v2181 = vrsqrt.pop %v2180
          %v2182 = vmul.f32 %v2171, %v2181
          %2183 = vst.msk [vmem:[#allocation5] sm:$0x3] %vm2088, %v2182
        $region96: #{tpu_custom_call.1} parent=87 // pred_fallthru
          _
        // Predicated region
        $region97: #{tpu_custom_call.1} parent=87 // pred_check
          %p2184 = pneg %p466
        $region98: #{tpu_custom_call.1} parent=87 // pred_check_branch
          %2186 = sbr.rel (%p2184) target = $region100
        $region99: #{tpu_custom_call.1} parent=87 // pred_region
          %s2188 = ssub.s32 32, 32
          %2189 = vsyncadd [#allocation6], %s2188
          %s2191 = sshll.u32 [#allocation5], 4
          %s2192 = int_to_ptr.vmem [resolvable:$true] %s2191
          %2194 = dma.vmem_to_hbm [thread:$0]  %s2192, 32, %s18, [#allocation6]
        $region100: #{tpu_custom_call.1} parent=87 // pred_fallthru
          _
        // Predicated region
        $region101: #{tpu_custom_call.1} parent=87 // pred_check
          %p2195 = pneg %p466
        $region102: #{tpu_custom_call.1} parent=87 // pred_check_branch
          %2197 = sbr.rel (%p2195) target = $region104
        $region103: #{tpu_custom_call.1} parent=87 // pred_region
          %2198 = dma.done [#allocation6], 32
        $region104: #{tpu_custom_call.1} parent=87 // pred_fallthru
          _
      $region88: #{tpu_custom_call.1} parent=5 // pred_fallthru
        _
      %p2199 = scmp.le.s32.totalorder 2, %s31
      // Predicated region
      $region105: #{tpu_custom_call.1} parent=5 // pred_check
        %p2200 = pneg %p2199
      $region106: #{tpu_custom_call.1} parent=5 // pred_check_branch
        %2202 = sbr.rel (%p2200) target = $region108
      $region107: #{tpu_custom_call.1} parent=5 // pred_region
        %s2203 = ssub.s32 %s31, 2
      $region108: #{tpu_custom_call.1} parent=5 // pred_fallthru
        _
    $region6: #{tpu_custom_call.1} parent=1 // loop_footer
      %s35 = sadd.s32 1, %s31
    $region7: #{tpu_custom_call.1} parent=1 // loop_footer_branch
      %30 = sbr.rel target = $region3
    $region8: #{tpu_custom_call.1} parent=1 // loop_exit
      _
    %2204 = vsyncpa [#allocation6], 1
    %s2205 = scalar_lea.sflag [#allocation6], 1
    %2206 = vsyncpa %s2205, 1

</llo_original>
